<compile_context>
chip_gen: v7x
topology: tpu7x:2x2x1
jax: 0.10.0
libtpu: 0.0.40
codegen_flags: <defaults>
</compile_context>

<pallas_src>
import functools
import numpy as np
import jax
import jax.numpy as jnp
from jax.experimental import pallas as pl
from jax.experimental.pallas import tpu as pltpu

# ---------------- configuration (small, consistent with the module) ----------------
BATCH = 4
FEAT_HW = (8, 8)                    # feature map partitioned into 4x4 windows
WINDOW = (4, 4)                     # window_size -> N = 16 tokens per window
N = WINDOW[0] * WINDOW[1]
NUM_WINDOWS = (FEAT_HW[0] // WINDOW[0]) * (FEAT_HW[1] // WINDOW[1])
B_ = BATCH * NUM_WINDOWS            # num_windows * batch = 16
DIM = 32                            # input channels C
NUM_HEADS = 4
HEAD_DIM = DIM // NUM_HEADS         # 8
HD = NUM_HEADS * HEAD_DIM           # 32
SCALE = HEAD_DIM ** (-0.5)


# ---------------- Pallas kernel ----------------
def window_attn_kernel(x_ref, qkvw_ref, qkvb_ref, projw_ref, projb_ref,
                       bias_ref, o_ref, *, num_heads, head_dim, scale):
    """One grid step = Bt windows flattened into an (M, C) token slab, M = Bt*N."""
    hd_all = num_heads * head_dim

    # qkv projection on the whole slab: bf16 MXU operands, f32 accumulation.
    x_bf = x_ref[...].astype(jnp.bfloat16)                            # (M, C)
    qkvw_bf = qkvw_ref[...].astype(jnp.bfloat16)                      # (C, 3*H*hd)
    qkv = jnp.dot(x_bf, qkvw_bf,
                  preferred_element_type=jnp.float32) + qkvb_ref[...]  # (M, 3*H*hd) f32

    head_outs = []
    for h in range(num_heads):                                        # small H, unrolled
        lo = h * head_dim
        q = (qkv[:, lo:lo + head_dim] * scale).astype(jnp.bfloat16)           # (M, hd)
        k = qkv[:, hd_all + lo:hd_all + lo + head_dim].astype(jnp.bfloat16)   # (M, hd)
        v = qkv[:, 2 * hd_all + lo:2 * hd_all + lo + head_dim].astype(jnp.bfloat16)

        # Scores for all Bt windows at once; cross-window entries are pushed to
        # -1e9 by the block-diagonal bias/mask so they vanish in the softmax.
        # Every row always has its own diagonal block unmasked, so the approx
        # reciprocal never sees a zero denominator.
        s = jnp.dot(q, k.T, preferred_element_type=jnp.float32)       # (M, M) f32
        s = s + bias_ref[h].astype(jnp.float32)                       # rel-pos bias + mask
        s = s - jnp.max(s, axis=-1, keepdims=True)                    # f32 softmax path
        e = jnp.exp(s)
        inv_l = pl.reciprocal(jnp.sum(e, axis=-1, keepdims=True), approx=True)
        o_h = jnp.dot(e.astype(jnp.bfloat16), v,
                      preferred_element_type=jnp.float32) * inv_l     # (M, hd) f32
        head_outs.append(o_h)

    # Lane-concatenate heads (XLU/vst, effectively free) -> one (M, H*hd)@(H*hd, C)
    # projection matmul instead of four skinny K=8 matmuls.
    o_all = jnp.concatenate(head_outs, axis=-1).astype(jnp.bfloat16)  # (M, H*hd)
    proj = jnp.dot(o_all, projw_ref[...].astype(jnp.bfloat16),
                   preferred_element_type=jnp.float32) + projb_ref[...]
    o_ref[...] = proj.astype(o_ref.dtype)


def _pick_block_windows(num_windows, tokens, target_rows=128):
    """Largest divisor of num_windows with ~target_rows tokens per grid step."""
    bt = max(1, min(num_windows, max(1, target_rows // tokens)))
    while num_windows % bt:
        bt -= 1
    return bt


def make_block_bias(rel_bias, bt):
    """Parameter-prep-time construction of the block-diagonal bias + window mask.

    Diagonal (N, N) blocks carry the per-head relative position bias, cross-window
    entries get -1e9 (softmax -> 0).  Stored bf16 to halve its DMA / VMEM footprint.
    Built once, NOT per forward call.
    """
    h, n, _ = rel_bias.shape
    m = bt * n
    wid = jnp.arange(m) // n
    off_window = jnp.where(wid[:, None] == wid[None, :], 0.0, -1e9).astype(jnp.float32)
    bias_mask = jnp.tile(rel_bias.astype(jnp.float32), (1, bt, bt)) + off_window[None]
    return bias_mask.astype(jnp.bfloat16)                             # (H, m, m)


def window_attention(x, qkv_w, qkv_b, proj_w, proj_b, bias_mask, bt):
    """x: (B_, N, C); bias_mask: (num_heads, bt*N, bt*N) bf16.  Returns (B_, N, C)."""
    Bn, n, c = x.shape
    num_heads = bias_mask.shape[0]
    hd_all = qkv_w.shape[1] // 3
    head_dim = hd_all // num_heads
    m = bt * n                               # token rows per grid step (128 here)
    assert Bn % bt == 0 and bias_mask.shape[1] == m

    # Flatten windows*tokens so each grid step DMAs one contiguous (m, c) slab.
    x2 = x.reshape(Bn * n, c)

    kernel = functools.partial(window_attn_kernel, num_heads=num_heads,
                               head_dim=head_dim, scale=head_dim ** (-0.5))

    out = pl.pallas_call(
        kernel,
        out_shape=jax.ShapeDtypeStruct((Bn * n, c), x.dtype),
        grid_spec=pltpu.PrefetchScalarGridSpec(
            num_scalar_prefetch=0,
            grid=(Bn // bt,),
            in_specs=[
                pl.BlockSpec((m, c), lambda b: (b, 0)),                     # x slab
                pl.BlockSpec((c, 3 * hd_all), lambda b: (0, 0)),            # qkv weight
                pl.BlockSpec((1, 3 * hd_all), lambda b: (0, 0)),            # qkv bias
                pl.BlockSpec((hd_all, c), lambda b: (0, 0)),                # proj weight
                pl.BlockSpec((1, c), lambda b: (0, 0)),                     # proj bias
                pl.BlockSpec((num_heads, m, m), lambda b: (0, 0, 0)),       # bias + mask
            ],
            out_specs=pl.BlockSpec((m, c), lambda b: (b, 0)),
        ),
        compiler_params=pltpu.CompilerParams(
            dimension_semantics=("parallel",)),
    )(x2, qkv_w, qkv_b, proj_w, proj_b, bias_mask)
    return out.reshape(Bn, n, c)


# ---------------- parameter / buffer setup (deterministic, in-script) ----------------
def make_relative_position_index(window_size):
    Wh, Ww = window_size
    coords_h = np.arange(Wh)
    coords_w = np.arange(Ww)
    coords = np.stack(np.meshgrid(coords_h, coords_w, indexing="ij"))  # (2, Wh, Ww)
    coords_flatten = coords.reshape(2, -1)                             # (2, Wh*Ww)
    relative_coords = coords_flatten[:, :, None] - coords_flatten[:, None, :]
    relative_coords = relative_coords.transpose(1, 2, 0)               # (N, N, 2)
    relative_coords[:, :, 0] += Wh - 1
    relative_coords[:, :, 1] += Ww - 1
    relative_coords[:, :, 0] *= 2 * Ww - 1
    return relative_coords.sum(-1)                                     # (N, N)


def reference_jax(x, qkv_w, qkv_b, proj_w, proj_b, rel_bias):
    # pure-JAX f32 reference replicating the PyTorch forward (conv=False, mask=None)
    Bn, n, c = x.shape
    qkv = x @ qkv_w + qkv_b[0]
    qkv = qkv.reshape(Bn, n, 3, NUM_HEADS, HEAD_DIM).transpose(2, 0, 3, 1, 4)
    q, k, v = qkv[0], qkv[1], qkv[2]
    q = q * SCALE
    attn = jnp.einsum("bhnd,bhmd->bhnm", q, k) + rel_bias[None]
    attn = jax.nn.softmax(attn, axis=-1)
    out = jnp.einsum("bhnm,bhmd->bhnd", attn, v)
    out = out.transpose(0, 2, 1, 3).reshape(Bn, n, NUM_HEADS * HEAD_DIM)
    return out @ proj_w + proj_b[0]


if __name__ == "__main__":
    key = jax.random.PRNGKey(0)
    k_x, k_qw, k_qb, k_pw, k_pb, k_tbl = jax.random.split(key, 6)

    x = jax.random.normal(k_x, (B_, N, DIM), dtype=jnp.float32)

    # nn.Linear(dim, 3*H*hd, bias=True)  -- stored transposed as (in, out)
    qkv_w = jax.random.normal(k_qw, (DIM, 3 * HD), dtype=jnp.float32) * 0.02
    qkv_b = jax.random.normal(k_qb, (1, 3 * HD), dtype=jnp.float32) * 0.02
    # nn.Linear(H*hd, dim)
    proj_w = jax.random.normal(k_pw, (HD, DIM), dtype=jnp.float32) * 0.02
    proj_b = jax.random.normal(k_pb, (1, DIM), dtype=jnp.float32) * 0.02

    # relative position bias table ((2Wh-1)*(2Ww-1), num_heads), trunc_normal(std=0.02)
    table = jax.random.normal(
        k_tbl, ((2 * WINDOW[0] - 1) * (2 * WINDOW[1] - 1), NUM_HEADS),
        dtype=jnp.float32) * 0.02
    rel_idx = jnp.asarray(make_relative_position_index(WINDOW))          # (N, N)
    rel_bias = table[rel_idx.reshape(-1)].reshape(N, N, NUM_HEADS)       # gather (glue)
    rel_bias = jnp.transpose(rel_bias, (2, 0, 1))                        # (H, N, N)

    # Parameter-prep-time (one-off) construction of the block-diagonal bias+mask.
    BT = _pick_block_windows(B_, N)                                      # 8 windows/step
    bias_mask = jax.block_until_ready(make_block_bias(rel_bias, BT))     # (H, 128, 128) bf16

    out = window_attention(x, qkv_w, qkv_b, proj_w, proj_b, bias_mask, BT)
    out = jax.block_until_ready(out)

    ref = reference_jax(x, qkv_w, qkv_b, proj_w, proj_b, rel_bias)
    # Tolerance covers bf16 MXU operands (f32 accumulation) + the approximate
    # EUP reciprocal used for the softmax denominator.
    np.testing.assert_allclose(np.asarray(out), np.asarray(ref),
                               rtol=2e-2, atol=2e-3)

    print("KERNEL_OK")
</pallas_src>

<mosaic_0001>
module attributes {stable_mosaic.version = 11 : i64} {
  func.func @window_attn_kernel(%arg0: i32, %arg1: memref<128x32xf32, #tpu.memory_space<vmem>>, %arg2: memref<32x96xf32, #tpu.memory_space<vmem>>, %arg3: memref<1x96xf32, #tpu.memory_space<vmem>>, %arg4: memref<32x32xf32, #tpu.memory_space<vmem>>, %arg5: memref<1x32xf32, #tpu.memory_space<vmem>>, %arg6: memref<4x128x128xbf16, #tpu.memory_space<vmem>>, %arg7: memref<128x32xf32, #tpu.memory_space<vmem>>) attributes {dimension_semantics = [#tpu.dimension_semantics<parallel>], iteration_bounds = array<i64: 2>, scalar_prefetch = 0 : i64, scratch_operands = 0 : i64, tpu.core_type = #tpu.core_type<tc>, window_params = [{transform_indices = @transform_0, window_bounds = array<i64: 128, 32>}, {pipeline_mode = #tpu.pipeline_mode<synchronous>, transform_indices = @transform_1, window_bounds = array<i64: 32, 96>}, {pipeline_mode = #tpu.pipeline_mode<synchronous>, transform_indices = @transform_2, window_bounds = array<i64: 1, 96>}, {pipeline_mode = #tpu.pipeline_mode<synchronous>, transform_indices = @transform_3, window_bounds = array<i64: 32, 32>}, {pipeline_mode = #tpu.pipeline_mode<synchronous>, transform_indices = @transform_4, window_bounds = array<i64: 1, 32>}, {pipeline_mode = #tpu.pipeline_mode<synchronous>, transform_indices = @transform_5, window_bounds = array<i64: 4, 128, 128>}, {transform_indices = @transform_6, window_bounds = array<i64: 128, 32>}]} {
    %c0 = arith.constant 0 : index
    %c0_0 = arith.constant 0 : index
    %0 = vector.load %arg1[%c0, %c0_0] : memref<128x32xf32, #tpu.memory_space<vmem>>, vector<128x32xf32>
    %1 = arith.truncf %0 : vector<128x32xf32> to vector<128x32xbf16>
    %c0_1 = arith.constant 0 : index
    %c0_2 = arith.constant 0 : index
    %2 = vector.load %arg2[%c0_1, %c0_2] : memref<32x96xf32, #tpu.memory_space<vmem>>, vector<32x96xf32>
    %3 = arith.truncf %2 : vector<32x96xf32> to vector<32x96xbf16>
    %cst = arith.constant dense<0.000000e+00> : vector<128x96xf32>
    %4 = tpu.matmul %1, %3, %cst {dimension_numbers = #tpu.dot_dimension_numbers<[1], [0], [0], [1], [0, 0, 1, 1], [], []>} : vector<128x32xbf16>, vector<32x96xbf16>, vector<128x96xf32> -> vector<128x96xf32>
    %c0_3 = arith.constant 0 : index
    %c0_4 = arith.constant 0 : index
    %5 = vector.load %arg3[%c0_3, %c0_4] : memref<1x96xf32, #tpu.memory_space<vmem>>, vector<1x96xf32>
    %6 = vector.broadcast %5 : vector<1x96xf32> to vector<128x96xf32>
    %7 = arith.addf %4, %6 : vector<128x96xf32>
    %8 = vector.extract_strided_slice %7 {offsets = [0, 0], sizes = [128, 8], strides = [1, 1]} : vector<128x96xf32> to vector<128x8xf32>
    %cst_5 = arith.constant 0.353553385 : f32
    %9 = vector.broadcast %cst_5 : f32 to vector<128x8xf32>
    %10 = arith.mulf %8, %9 : vector<128x8xf32>
    %11 = arith.truncf %10 : vector<128x8xf32> to vector<128x8xbf16>
    %12 = vector.extract_strided_slice %7 {offsets = [0, 32], sizes = [128, 8], strides = [1, 1]} : vector<128x96xf32> to vector<128x8xf32>
    %13 = arith.truncf %12 : vector<128x8xf32> to vector<128x8xbf16>
    %14 = vector.extract_strided_slice %7 {offsets = [0, 64], sizes = [128, 8], strides = [1, 1]} : vector<128x96xf32> to vector<128x8xf32>
    %15 = arith.truncf %14 : vector<128x8xf32> to vector<128x8xbf16>
    %16 = tpu.transpose %13, [1, 0] : vector<128x8xbf16> -> vector<8x128xbf16>
    %cst_6 = arith.constant dense<0.000000e+00> : vector<128x128xf32>
    %17 = tpu.matmul %11, %16, %cst_6 {dimension_numbers = #tpu.dot_dimension_numbers<[1], [0], [0], [1], [0, 0, 1, 1], [], []>} : vector<128x8xbf16>, vector<8x128xbf16>, vector<128x128xf32> -> vector<128x128xf32>
    %c0_7 = arith.constant 0 : index
    %c0_8 = arith.constant 0 : index
    %c0_9 = arith.constant 0 : index
    %18 = vector.load %arg6[%c0_7, %c0_8, %c0_9] : memref<4x128x128xbf16, #tpu.memory_space<vmem>>, vector<1x128x128xbf16>
    %19 = vector.shape_cast %18 : vector<1x128x128xbf16> to vector<128x128xbf16>
    %20 = arith.extf %19 : vector<128x128xbf16> to vector<128x128xf32>
    %21 = arith.addf %17, %20 : vector<128x128xf32>
    %cst_10 = arith.constant dense<0xFF800000> : vector<128xf32>
    %22 = vector.multi_reduction <maximumf>, %21, %cst_10 [1] : vector<128x128xf32> to vector<128xf32>
    %23 = vector.shape_cast %22 : vector<128xf32> to vector<128x1xf32>
    %24 = vector.broadcast %23 : vector<128x1xf32> to vector<128x128xf32>
    %25 = arith.subf %21, %24 : vector<128x128xf32>
    %26 = math.exp %25 : vector<128x128xf32>
    %cst_11 = arith.constant dense<0.000000e+00> : vector<128xf32>
    %27 = vector.multi_reduction <add>, %26, %cst_11 [1] : vector<128x128xf32> to vector<128xf32>
    %28 = vector.shape_cast %27 : vector<128xf32> to vector<128x1xf32>
    %29 = tpu.reciprocal %28 {approx = true} : vector<128x1xf32> -> vector<128x1xf32>
    %30 = arith.truncf %26 : vector<128x128xf32> to vector<128x128xbf16>
    %cst_12 = arith.constant dense<0.000000e+00> : vector<128x8xf32>
    %31 = tpu.matmul %30, %15, %cst_12 {dimension_numbers = #tpu.dot_dimension_numbers<[1], [0], [0], [1], [0, 0, 1, 1], [], []>} : vector<128x128xbf16>, vector<128x8xbf16>, vector<128x8xf32> -> vector<128x8xf32>
    %32 = vector.broadcast %29 : vector<128x1xf32> to vector<128x8xf32>
    %33 = arith.mulf %31, %32 : vector<128x8xf32>
    %34 = vector.extract_strided_slice %7 {offsets = [0, 8], sizes = [128, 8], strides = [1, 1]} : vector<128x96xf32> to vector<128x8xf32>
    %cst_13 = arith.constant 0.353553385 : f32
    %35 = vector.broadcast %cst_13 : f32 to vector<128x8xf32>
    %36 = arith.mulf %34, %35 : vector<128x8xf32>
    %37 = arith.truncf %36 : vector<128x8xf32> to vector<128x8xbf16>
    %38 = vector.extract_strided_slice %7 {offsets = [0, 40], sizes = [128, 8], strides = [1, 1]} : vector<128x96xf32> to vector<128x8xf32>
    %39 = arith.truncf %38 : vector<128x8xf32> to vector<128x8xbf16>
    %40 = vector.extract_strided_slice %7 {offsets = [0, 72], sizes = [128, 8], strides = [1, 1]} : vector<128x96xf32> to vector<128x8xf32>
    %41 = arith.truncf %40 : vector<128x8xf32> to vector<128x8xbf16>
    %42 = tpu.transpose %39, [1, 0] : vector<128x8xbf16> -> vector<8x128xbf16>
    %cst_14 = arith.constant dense<0.000000e+00> : vector<128x128xf32>
    %43 = tpu.matmul %37, %42, %cst_14 {dimension_numbers = #tpu.dot_dimension_numbers<[1], [0], [0], [1], [0, 0, 1, 1], [], []>} : vector<128x8xbf16>, vector<8x128xbf16>, vector<128x128xf32> -> vector<128x128xf32>
    %c1 = arith.constant 1 : index
    %c0_15 = arith.constant 0 : index
    %c0_16 = arith.constant 0 : index
    %44 = vector.load %arg6[%c1, %c0_15, %c0_16] : memref<4x128x128xbf16, #tpu.memory_space<vmem>>, vector<1x128x128xbf16>
    %45 = vector.shape_cast %44 : vector<1x128x128xbf16> to vector<128x128xbf16>
    %46 = arith.extf %45 : vector<128x128xbf16> to vector<128x128xf32>
    %47 = arith.addf %43, %46 : vector<128x128xf32>
    %cst_17 = arith.constant dense<0xFF800000> : vector<128xf32>
    %48 = vector.multi_reduction <maximumf>, %47, %cst_17 [1] : vector<128x128xf32> to vector<128xf32>
    %49 = vector.shape_cast %48 : vector<128xf32> to vector<128x1xf32>
    %50 = vector.broadcast %49 : vector<128x1xf32> to vector<128x128xf32>
    %51 = arith.subf %47, %50 : vector<128x128xf32>
    %52 = math.exp %51 : vector<128x128xf32>
    %cst_18 = arith.constant dense<0.000000e+00> : vector<128xf32>
    %53 = vector.multi_reduction <add>, %52, %cst_18 [1] : vector<128x128xf32> to vector<128xf32>
    %54 = vector.shape_cast %53 : vector<128xf32> to vector<128x1xf32>
    %55 = tpu.reciprocal %54 {approx = true} : vector<128x1xf32> -> vector<128x1xf32>
    %56 = arith.truncf %52 : vector<128x128xf32> to vector<128x128xbf16>
    %cst_19 = arith.constant dense<0.000000e+00> : vector<128x8xf32>
    %57 = tpu.matmul %56, %41, %cst_19 {dimension_numbers = #tpu.dot_dimension_numbers<[1], [0], [0], [1], [0, 0, 1, 1], [], []>} : vector<128x128xbf16>, vector<128x8xbf16>, vector<128x8xf32> -> vector<128x8xf32>
    %58 = vector.broadcast %55 : vector<128x1xf32> to vector<128x8xf32>
    %59 = arith.mulf %57, %58 : vector<128x8xf32>
    %60 = vector.extract_strided_slice %7 {offsets = [0, 16], sizes = [128, 8], strides = [1, 1]} : vector<128x96xf32> to vector<128x8xf32>
    %cst_20 = arith.constant 0.353553385 : f32
    %61 = vector.broadcast %cst_20 : f32 to vector<128x8xf32>
    %62 = arith.mulf %60, %61 : vector<128x8xf32>
    %63 = arith.truncf %62 : vector<128x8xf32> to vector<128x8xbf16>
    %64 = vector.extract_strided_slice %7 {offsets = [0, 48], sizes = [128, 8], strides = [1, 1]} : vector<128x96xf32> to vector<128x8xf32>
    %65 = arith.truncf %64 : vector<128x8xf32> to vector<128x8xbf16>
    %66 = vector.extract_strided_slice %7 {offsets = [0, 80], sizes = [128, 8], strides = [1, 1]} : vector<128x96xf32> to vector<128x8xf32>
    %67 = arith.truncf %66 : vector<128x8xf32> to vector<128x8xbf16>
    %68 = tpu.transpose %65, [1, 0] : vector<128x8xbf16> -> vector<8x128xbf16>
    %cst_21 = arith.constant dense<0.000000e+00> : vector<128x128xf32>
    %69 = tpu.matmul %63, %68, %cst_21 {dimension_numbers = #tpu.dot_dimension_numbers<[1], [0], [0], [1], [0, 0, 1, 1], [], []>} : vector<128x8xbf16>, vector<8x128xbf16>, vector<128x128xf32> -> vector<128x128xf32>
    %c2 = arith.constant 2 : index
    %c0_22 = arith.constant 0 : index
    %c0_23 = arith.constant 0 : index
    %70 = vector.load %arg6[%c2, %c0_22, %c0_23] : memref<4x128x128xbf16, #tpu.memory_space<vmem>>, vector<1x128x128xbf16>
    %71 = vector.shape_cast %70 : vector<1x128x128xbf16> to vector<128x128xbf16>
    %72 = arith.extf %71 : vector<128x128xbf16> to vector<128x128xf32>
    %73 = arith.addf %69, %72 : vector<128x128xf32>
    %cst_24 = arith.constant dense<0xFF800000> : vector<128xf32>
    %74 = vector.multi_reduction <maximumf>, %73, %cst_24 [1] : vector<128x128xf32> to vector<128xf32>
    %75 = vector.shape_cast %74 : vector<128xf32> to vector<128x1xf32>
    %76 = vector.broadcast %75 : vector<128x1xf32> to vector<128x128xf32>
    %77 = arith.subf %73, %76 : vector<128x128xf32>
    %78 = math.exp %77 : vector<128x128xf32>
    %cst_25 = arith.constant dense<0.000000e+00> : vector<128xf32>
    %79 = vector.multi_reduction <add>, %78, %cst_25 [1] : vector<128x128xf32> to vector<128xf32>
    %80 = vector.shape_cast %79 : vector<128xf32> to vector<128x1xf32>
    %81 = tpu.reciprocal %80 {approx = true} : vector<128x1xf32> -> vector<128x1xf32>
    %82 = arith.truncf %78 : vector<128x128xf32> to vector<128x128xbf16>
    %cst_26 = arith.constant dense<0.000000e+00> : vector<128x8xf32>
    %83 = tpu.matmul %82, %67, %cst_26 {dimension_numbers = #tpu.dot_dimension_numbers<[1], [0], [0], [1], [0, 0, 1, 1], [], []>} : vector<128x128xbf16>, vector<128x8xbf16>, vector<128x8xf32> -> vector<128x8xf32>
    %84 = vector.broadcast %81 : vector<128x1xf32> to vector<128x8xf32>
    %85 = arith.mulf %83, %84 : vector<128x8xf32>
    %86 = vector.extract_strided_slice %7 {offsets = [0, 24], sizes = [128, 8], strides = [1, 1]} : vector<128x96xf32> to vector<128x8xf32>
    %cst_27 = arith.constant 0.353553385 : f32
    %87 = vector.broadcast %cst_27 : f32 to vector<128x8xf32>
    %88 = arith.mulf %86, %87 : vector<128x8xf32>
    %89 = arith.truncf %88 : vector<128x8xf32> to vector<128x8xbf16>
    %90 = vector.extract_strided_slice %7 {offsets = [0, 56], sizes = [128, 8], strides = [1, 1]} : vector<128x96xf32> to vector<128x8xf32>
    %91 = arith.truncf %90 : vector<128x8xf32> to vector<128x8xbf16>
    %92 = vector.extract_strided_slice %7 {offsets = [0, 88], sizes = [128, 8], strides = [1, 1]} : vector<128x96xf32> to vector<128x8xf32>
    %93 = arith.truncf %92 : vector<128x8xf32> to vector<128x8xbf16>
    %94 = tpu.transpose %91, [1, 0] : vector<128x8xbf16> -> vector<8x128xbf16>
    %cst_28 = arith.constant dense<0.000000e+00> : vector<128x128xf32>
    %95 = tpu.matmul %89, %94, %cst_28 {dimension_numbers = #tpu.dot_dimension_numbers<[1], [0], [0], [1], [0, 0, 1, 1], [], []>} : vector<128x8xbf16>, vector<8x128xbf16>, vector<128x128xf32> -> vector<128x128xf32>
    %c3 = arith.constant 3 : index
    %c0_29 = arith.constant 0 : index
    %c0_30 = arith.constant 0 : index
    %96 = vector.load %arg6[%c3, %c0_29, %c0_30] : memref<4x128x128xbf16, #tpu.memory_space<vmem>>, vector<1x128x128xbf16>
    %97 = vector.shape_cast %96 : vector<1x128x128xbf16> to vector<128x128xbf16>
    %98 = arith.extf %97 : vector<128x128xbf16> to vector<128x128xf32>
    %99 = arith.addf %95, %98 : vector<128x128xf32>
    %cst_31 = arith.constant dense<0xFF800000> : vector<128xf32>
    %100 = vector.multi_reduction <maximumf>, %99, %cst_31 [1] : vector<128x128xf32> to vector<128xf32>
    %101 = vector.shape_cast %100 : vector<128xf32> to vector<128x1xf32>
    %102 = vector.broadcast %101 : vector<128x1xf32> to vector<128x128xf32>
    %103 = arith.subf %99, %102 : vector<128x128xf32>
    %104 = math.exp %103 : vector<128x128xf32>
    %cst_32 = arith.constant dense<0.000000e+00> : vector<128xf32>
    %105 = vector.multi_reduction <add>, %104, %cst_32 [1] : vector<128x128xf32> to vector<128xf32>
    %106 = vector.shape_cast %105 : vector<128xf32> to vector<128x1xf32>
    %107 = tpu.reciprocal %106 {approx = true} : vector<128x1xf32> -> vector<128x1xf32>
    %108 = arith.truncf %104 : vector<128x128xf32> to vector<128x128xbf16>
    %cst_33 = arith.constant dense<0.000000e+00> : vector<128x8xf32>
    %109 = tpu.matmul %108, %93, %cst_33 {dimension_numbers = #tpu.dot_dimension_numbers<[1], [0], [0], [1], [0, 0, 1, 1], [], []>} : vector<128x128xbf16>, vector<128x8xbf16>, vector<128x8xf32> -> vector<128x8xf32>
    %110 = vector.broadcast %107 : vector<128x1xf32> to vector<128x8xf32>
    %111 = arith.mulf %109, %110 : vector<128x8xf32>
    %112 = tpu.concatenate %33, %59, %85, %111 in 1 : vector<128x8xf32>, vector<128x8xf32>, vector<128x8xf32>, vector<128x8xf32> -> vector<128x32xf32>
    %113 = arith.truncf %112 : vector<128x32xf32> to vector<128x32xbf16>
    %c0_34 = arith.constant 0 : index
    %c0_35 = arith.constant 0 : index
    %114 = vector.load %arg4[%c0_34, %c0_35] : memref<32x32xf32, #tpu.memory_space<vmem>>, vector<32x32xf32>
    %115 = arith.truncf %114 : vector<32x32xf32> to vector<32x32xbf16>
    %cst_36 = arith.constant dense<0.000000e+00> : vector<128x32xf32>
    %116 = tpu.matmul %113, %115, %cst_36 {dimension_numbers = #tpu.dot_dimension_numbers<[1], [0], [0], [1], [0, 0, 1, 1], [], []>} : vector<128x32xbf16>, vector<32x32xbf16>, vector<128x32xf32> -> vector<128x32xf32>
    %c0_37 = arith.constant 0 : index
    %c0_38 = arith.constant 0 : index
    %117 = vector.load %arg5[%c0_37, %c0_38] : memref<1x32xf32, #tpu.memory_space<vmem>>, vector<1x32xf32>
    %118 = vector.broadcast %117 : vector<1x32xf32> to vector<128x32xf32>
    %119 = arith.addf %116, %118 : vector<128x32xf32>
    %c0_39 = arith.constant 0 : index
    %c0_40 = arith.constant 0 : index
    %120 = vector.load %arg7[%c0_39, %c0_40] : memref<128x32xf32, #tpu.memory_space<vmem>>, vector<128x32xf32>
    tpu.vector_store %arg7[%c0_39, %c0_40], %119 {strides = array<i32>} : memref<128x32xf32, #tpu.memory_space<vmem>>, vector<128x32xf32>,
    return
  }
  func.func @transform_0(%arg0: i32) -> (i32, i32) {
    %c0_i32 = arith.constant 0 : i32
    %c0_i32_0 = arith.constant 0 : i32
    return %arg0, %c0_i32 : i32, i32
  }
  func.func @transform_1(%arg0: i32) -> (i32, i32) {
    %c0_i32 = arith.constant 0 : i32
    %c0_i32_0 = arith.constant 0 : i32
    %c0_i32_1 = arith.constant 0 : i32
    return %c0_i32, %c0_i32_0 : i32, i32
  }
  func.func @transform_2(%arg0: i32) -> (i32, i32) {
    %c0_i32 = arith.constant 0 : i32
    %c0_i32_0 = arith.constant 0 : i32
    %c0_i32_1 = arith.constant 0 : i32
    return %c0_i32, %c0_i32_0 : i32, i32
  }
  func.func @transform_3(%arg0: i32) -> (i32, i32) {
    %c0_i32 = arith.constant 0 : i32
    %c0_i32_0 = arith.constant 0 : i32
    %c0_i32_1 = arith.constant 0 : i32
    return %c0_i32, %c0_i32_0 : i32, i32
  }
  func.func @transform_4(%arg0: i32) -> (i32, i32) {
    %c0_i32 = arith.constant 0 : i32
    %c0_i32_0 = arith.constant 0 : i32
    %c0_i32_1 = arith.constant 0 : i32
    return %c0_i32, %c0_i32_0 : i32, i32
  }
  func.func @transform_5(%arg0: i32) -> (i32, i32, i32) {
    %c0_i32 = arith.constant 0 : i32
    %c0_i32_0 = arith.constant 0 : i32
    %c0_i32_1 = arith.constant 0 : i32
    %c0_i32_2 = arith.constant 0 : i32
    return %c0_i32, %c0_i32_0, %c0_i32_1 : i32, i32, i32
  }
  func.func @transform_6(%arg0: i32) -> (i32, i32) {
    %c0_i32 = arith.constant 0 : i32
    %c0_i32_0 = arith.constant 0 : i32
    return %arg0, %c0_i32 : i32, i32
  }
}

</mosaic_0001>

<llo_original>
// kernel: tpu_custom_call.1
$region0: #{tpu_custom_call.1}
  #allocation0 [shape = 'u32[]', space=smem, size = 0x4, offset = 0x4, fixed_abs, tag = 'smem constant byte address 0x4 - core index']
  #allocation1 [shape = 'u32[144,128]{1,0:T(1,128)}', space=vmem, size = 0x12000, scoped, tag = 'internal scratch']
  %s0 = inlined_call_operand.vmem [shape: f32[256,32], index: 0, kind: input, shape index: {}]
  %s1 = inlined_call_operand.vmem [shape: f32[32,96], index: 1, kind: input, shape index: {}]
  %s2 = inlined_call_operand.vmem [shape: f32[1,96], index: 2, kind: input, shape index: {}]
  %s3 = inlined_call_operand.vmem [shape: f32[32,32], index: 3, kind: input, shape index: {}]
  %s4 = inlined_call_operand.vmem [shape: f32[1,32], index: 4, kind: input, shape index: {}]
  %s5 = inlined_call_operand.vmem [shape: bf16[4,128,128], index: 5, kind: input, shape index: {}]
  %s6 = inlined_call_operand.vmem [shape: f32[256,32], index: 6, kind: output, shape index: {}]
  %s7 = sld [smem:[#allocation0]]
  $region57: #{tpu_custom_call.1} parent=0
    _
  %s9 = ssub.s32 1, %s7
  %s10 = scalar_select 0, %s9, %s7
  loop: start=0, step=1, limit=4
  $region2: #{tpu_custom_call.1} parent=0 // loop_pre_header
    _
  $region3: #{tpu_custom_call.1} parent=0 // loop_header
    %s12 = sphi 0, %s16
    %p13 = scmp.ge.s32.totalorder %s12, 4
    %s22 = sphi 0, %s24
    %s25 = sphi 0, %s22
    %s26 = sphi 0, %s25
    %s42 = sphi 0, %s26
    %s46 = sphi 0, %s46
    %s48 = sphi 0, %s46
    %s49 = sphi 0, %s48
    %s63 = sphi 0, %s49
    %s67 = sphi 0, %s67
    %s69 = sphi 0, %s67
    %s70 = sphi 0, %s69
    %s84 = sphi 0, %s70
    %s88 = sphi 0, %s88
    %s90 = sphi 0, %s88
    %s91 = sphi 0, %s90
    %s105 = sphi 0, %s91
    %s109 = sphi 0, %s109
    %s111 = sphi 0, %s109
    %s112 = sphi 0, %s111
    %s126 = sphi 0, %s112
    %s130 = sphi 0, %s130
    %s132 = sphi 0, %s130
    %s133 = sphi 0, %s132
    %s147 = sphi 0, %s133
    %s153 = sphi 0, %s155
    %s156 = sphi 0, %s153
    %s157 = sphi 0, %s156
    %s173 = sphi 0, %s157
  $region4: #{tpu_custom_call.1} parent=0 // loop_header_branch
    %15 = sbr.rel (%p13) target = $region8
  $region5: #{tpu_custom_call.1} parent=0 // loop_body
    %s17 = ssub.s32 %s12, 1
    %s18 = ssub.s32 %s12, 2
    %s19 = sadd.s32 %s12, 1
    %s20 = ssub.s32 %s12, %s19
    %p21 = scmp.eq.s32.totalorder %s20, 0
    %s23 = sadd.s32 %s22, 1
    %s24 = scalar_select %p21, %s22, %s23
    %p27 = pneg %p21
    %p28 = scmp.eq.s32.totalorder %s12, 1
    %p29 = por %p27, %p28
    %p30 = scmp.ne.s32.totalorder %s22, %s25
    %p31 = scmp.eq.s32.totalorder %s12, 0
    %p32 = por %p30, %p31
    %p33 = scmp.ne.s32.totalorder %s22, %s25
    %p34 = scmp.eq.s32.totalorder %s17, 1
    %p35 = por %p33, %p34
    %p36 = scmp.ne.s32.totalorder %s25, %s26
    %p37 = scmp.eq.s32.totalorder %s17, 0
    %p38 = por %p36, %p37
    %p39 = scmp.ne.s32.totalorder %s25, %s26
    %p40 = scmp.eq.s32.totalorder %s18, 1
    %p41 = por %p39, %p40
    %p43 = scmp.ne.s32.totalorder %s26, %s42
    %p44 = scmp.eq.s32.totalorder %s18, 0
    %p45 = por %p43, %p44
    %s47 = sadd.s32 %s46, 1
    %p50 = scmp.eq.s32.totalorder %s12, 1
    %p51 = scmp.ne.s32.totalorder %s46, %s48
    %p52 = scmp.eq.s32.totalorder %s12, 0
    %p53 = por %p51, %p52
    %p54 = scmp.ne.s32.totalorder %s46, %s48
    %p55 = scmp.eq.s32.totalorder %s17, 1
    %p56 = por %p54, %p55
    %p57 = scmp.ne.s32.totalorder %s48, %s49
    %p58 = scmp.eq.s32.totalorder %s17, 0
    %p59 = por %p57, %p58
    %p60 = scmp.ne.s32.totalorder %s48, %s49
    %p61 = scmp.eq.s32.totalorder %s18, 1
    %p62 = por %p60, %p61
    %p64 = scmp.ne.s32.totalorder %s49, %s63
    %p65 = scmp.eq.s32.totalorder %s18, 0
    %p66 = por %p64, %p65
    %s68 = sadd.s32 %s67, 1
    %p71 = scmp.eq.s32.totalorder %s12, 1
    %p72 = scmp.ne.s32.totalorder %s67, %s69
    %p73 = scmp.eq.s32.totalorder %s12, 0
    %p74 = por %p72, %p73
    %p75 = scmp.ne.s32.totalorder %s67, %s69
    %p76 = scmp.eq.s32.totalorder %s17, 1
    %p77 = por %p75, %p76
    %p78 = scmp.ne.s32.totalorder %s69, %s70
    %p79 = scmp.eq.s32.totalorder %s17, 0
    %p80 = por %p78, %p79
    %p81 = scmp.ne.s32.totalorder %s69, %s70
    %p82 = scmp.eq.s32.totalorder %s18, 1
    %p83 = por %p81, %p82
    %p85 = scmp.ne.s32.totalorder %s70, %s84
    %p86 = scmp.eq.s32.totalorder %s18, 0
    %p87 = por %p85, %p86
    %s89 = sadd.s32 %s88, 1
    %p92 = scmp.eq.s32.totalorder %s12, 1
    %p93 = scmp.ne.s32.totalorder %s88, %s90
    %p94 = scmp.eq.s32.totalorder %s12, 0
    %p95 = por %p93, %p94
    %p96 = scmp.ne.s32.totalorder %s88, %s90
    %p97 = scmp.eq.s32.totalorder %s17, 1
    %p98 = por %p96, %p97
    %p99 = scmp.ne.s32.totalorder %s90, %s91
    %p100 = scmp.eq.s32.totalorder %s17, 0
    %p101 = por %p99, %p100
    %p102 = scmp.ne.s32.totalorder %s90, %s91
    %p103 = scmp.eq.s32.totalorder %s18, 1
    %p104 = por %p102, %p103
    %p106 = scmp.ne.s32.totalorder %s91, %s105
    %p107 = scmp.eq.s32.totalorder %s18, 0
    %p108 = por %p106, %p107
    %s110 = sadd.s32 %s109, 1
    %p113 = scmp.eq.s32.totalorder %s12, 1
    %p114 = scmp.ne.s32.totalorder %s109, %s111
    %p115 = scmp.eq.s32.totalorder %s12, 0
    %p116 = por %p114, %p115
    %p117 = scmp.ne.s32.totalorder %s109, %s111
    %p118 = scmp.eq.s32.totalorder %s17, 1
    %p119 = por %p117, %p118
    %p120 = scmp.ne.s32.totalorder %s111, %s112
    %p121 = scmp.eq.s32.totalorder %s17, 0
    %p122 = por %p120, %p121
    %p123 = scmp.ne.s32.totalorder %s111, %s112
    %p124 = scmp.eq.s32.totalorder %s18, 1
    %p125 = por %p123, %p124
    %p127 = scmp.ne.s32.totalorder %s112, %s126
    %p128 = scmp.eq.s32.totalorder %s18, 0
    %p129 = por %p127, %p128
    %s131 = sadd.s32 %s130, 1
    %p134 = scmp.eq.s32.totalorder %s12, 1
    %p135 = scmp.ne.s32.totalorder %s130, %s132
    %p136 = scmp.eq.s32.totalorder %s12, 0
    %p137 = por %p135, %p136
    %p138 = scmp.ne.s32.totalorder %s130, %s132
    %p139 = scmp.eq.s32.totalorder %s17, 1
    %p140 = por %p138, %p139
    %p141 = scmp.ne.s32.totalorder %s132, %s133
    %p142 = scmp.eq.s32.totalorder %s17, 0
    %p143 = por %p141, %p142
    %p144 = scmp.ne.s32.totalorder %s132, %s133
    %p145 = scmp.eq.s32.totalorder %s18, 1
    %p146 = por %p144, %p145
    %p148 = scmp.ne.s32.totalorder %s133, %s147
    %p149 = scmp.eq.s32.totalorder %s18, 0
    %p150 = por %p148, %p149
    %s151 = ssub.s32 %s12, %s19
    %p152 = scmp.eq.s32.totalorder %s151, 0
    %s154 = sadd.s32 %s153, 1
    %s155 = scalar_select %p152, %s153, %s154
    %p158 = pneg %p152
    %p159 = scmp.eq.s32.totalorder %s12, 1
    %p160 = por %p158, %p159
    %p161 = scmp.ne.s32.totalorder %s153, %s156
    %p162 = scmp.eq.s32.totalorder %s12, 0
    %p163 = por %p161, %p162
    %p164 = scmp.ne.s32.totalorder %s153, %s156
    %p165 = scmp.eq.s32.totalorder %s17, 1
    %p166 = por %p164, %p165
    %p167 = scmp.ne.s32.totalorder %s156, %s157
    %p168 = scmp.eq.s32.totalorder %s17, 0
    %p169 = por %p167, %p168
    %p170 = scmp.ne.s32.totalorder %s156, %s157
    %p171 = scmp.eq.s32.totalorder %s18, 1
    %p172 = por %p170, %p171
    %p174 = scmp.ne.s32.totalorder %s157, %s173
    %p175 = scmp.eq.s32.totalorder %s18, 0
    %p176 = por %p174, %p175
    %p177 = scmp.le.s32.totalorder 1, %s12
    %p178 = scmp.lt.s32.totalorder %s12, 3
    %p179 = pnand %p177, %p178
    %p180 = pneg %p179
    // Predicated region
    $region9: #{tpu_custom_call.1} parent=5 // pred_check
      _
    $region10: #{tpu_custom_call.1} parent=5 // pred_check_branch
      %182 = sbr.rel (%p179) target = $region12
    $region11: #{tpu_custom_call.1} parent=5 // pred_region
      %s183 = ssub.s32 %s12, 1
      // Predicated region
      $region13: #{tpu_custom_call.1} parent=11 // pred_check
        %p184 = pneg %p59
      $region14: #{tpu_custom_call.1} parent=11 // pred_check_branch
        %186 = sbr.rel (%p184) target = $region16
      $region15: #{tpu_custom_call.1} parent=11 // pred_region
        _
      $region16: #{tpu_custom_call.1} parent=11 // pred_fallthru
        _
      // Predicated region
      $region17: #{tpu_custom_call.1} parent=11 // pred_check
        %p187 = pneg %p80
      $region18: #{tpu_custom_call.1} parent=11 // pred_check_branch
        %189 = sbr.rel (%p187) target = $region20
      $region19: #{tpu_custom_call.1} parent=11 // pred_region
        _
      $region20: #{tpu_custom_call.1} parent=11 // pred_fallthru
        _
      // Predicated region
      $region21: #{tpu_custom_call.1} parent=11 // pred_check
        %p190 = pneg %p101
      $region22: #{tpu_custom_call.1} parent=11 // pred_check_branch
        %192 = sbr.rel (%p190) target = $region24
      $region23: #{tpu_custom_call.1} parent=11 // pred_region
        _
      $region24: #{tpu_custom_call.1} parent=11 // pred_fallthru
        _
      // Predicated region
      $region25: #{tpu_custom_call.1} parent=11 // pred_check
        %p193 = pneg %p122
      $region26: #{tpu_custom_call.1} parent=11 // pred_check_branch
        %195 = sbr.rel (%p193) target = $region28
      $region27: #{tpu_custom_call.1} parent=11 // pred_region
        _
      $region28: #{tpu_custom_call.1} parent=11 // pred_fallthru
        _
      // Predicated region
      $region29: #{tpu_custom_call.1} parent=11 // pred_check
        %p196 = pneg %p143
      $region30: #{tpu_custom_call.1} parent=11 // pred_check_branch
        %198 = sbr.rel (%p196) target = $region32
      $region31: #{tpu_custom_call.1} parent=11 // pred_region
        _
      $region32: #{tpu_custom_call.1} parent=11 // pred_fallthru
        _
    $region12: #{tpu_custom_call.1} parent=5 // pred_fallthru
      _
    %p199 = scmp.lt.s32.totalorder %s12, 2
    // Predicated region
    $region33: #{tpu_custom_call.1} parent=5 // pred_check
      %p200 = pneg %p199
    $region34: #{tpu_custom_call.1} parent=5 // pred_check_branch
      %202 = sbr.rel (%p200) target = $region36
    $region35: #{tpu_custom_call.1} parent=5 // pred_region
      // Predicated region
      $region37: #{tpu_custom_call.1} parent=35 // pred_check
        %p203 = pneg %p32
      $region38: #{tpu_custom_call.1} parent=35 // pred_check_branch
        %205 = sbr.rel (%p203) target = $region40
      $region39: #{tpu_custom_call.1} parent=35 // pred_region
        %s206 = smul.u32 16, %s12
        %p207 = scmp.lt.s32.totalorder %s206, 31
        %s208 = scalar_select %p207, %s206, 31
        %s209 = smul.addr %s208, 8
        %s210 = scalar_lea.vmem %s0, %s209
        %s211 = smul.u32 16, %s12
      $region40: #{tpu_custom_call.1} parent=35 // pred_fallthru
        _
    $region36: #{tpu_custom_call.1} parent=5 // pred_fallthru
      _
    %p212 = scmp.le.s32.totalorder 1, %s12
    %p213 = scmp.lt.s32.totalorder %s12, 3
    %p214 = pnand %p212, %p213
    %p215 = pneg %p214
    // Predicated region
    $region41: #{tpu_custom_call.1} parent=5 // pred_check
      _
    $region42: #{tpu_custom_call.1} parent=5 // pred_check_branch
      %217 = sbr.rel (%p214) target = $region44
    $region43: #{tpu_custom_call.1} parent=5 // pred_region
      %s218 = ssub.s32 %s12, 1
      %s219 = smul.u32 16, %s17
      %p220 = scmp.lt.s32.totalorder %s219, 31
      %s221 = scalar_select %p220, %s219, 31
      %s222 = smul.addr %s221, 8
      %s223 = scalar_lea.vmem %s0, %s222
      %p224 = pneg %p38
      %p225 = pneg %p35
      %p226 = pneg %p59
      %p227 = pneg %p56
      %p228 = pneg %p80
      %p229 = pneg %p77
      %p230 = pneg %p101
      %p231 = pneg %p98
      %p232 = pneg %p122
      %p233 = pneg %p119
      %p234 = pneg %p143
      %p235 = pneg %p140
      %p236 = pneg %p169
      %p237 = pneg %p166
      %s238 = smul.u32 16, %s17
      %p239 = scmp.lt.s32.totalorder %s238, 31
      %s240 = scalar_select %p239, %s238, 31
      %s241 = smul.addr %s240, 8
      %s242 = scalar_lea.vmem %s6, %s241
      %s243 = smul.u32 16, %s17
      %p244 = scmp.lt.s32.totalorder %s243, 31
      %s245 = scalar_select %p244, %s243, 31
      %s246 = smul.addr %s245, 8
      %s247 = scalar_lea.vmem %s0, %s246
      %s248 = smul.u32 16, %s17
      %s249 = smul.u32 16, %s17
      %p250 = scmp.lt.s32.totalorder %s249, 31
      %s251 = scalar_select %p250, %s249, 31
      %s252 = smul.addr %s251, 8
      %s253 = scalar_lea.vmem %s6, %s252
      %s254 = smul.u32 16, %s17
      %v256 = vld [vmem:[%s247] sm:$0xff]
      %v257 = vld [vmem:[%s247 + $0x8] sm:$0xff]
      %v258 = vld [vmem:[%s247 + $0x10] sm:$0xff]
      %v259 = vld [vmem:[%s247 + $0x18] sm:$0xff]
      %v260 = vld [vmem:[%s247 + $0x20] sm:$0xff]
      %v261 = vld [vmem:[%s247 + $0x28] sm:$0xff]
      %v262 = vld [vmem:[%s247 + $0x30] sm:$0xff]
      %v263 = vld [vmem:[%s247 + $0x38] sm:$0xff]
      %v264 = vld [vmem:[%s247 + $0x40] sm:$0xff]
      %v265 = vld [vmem:[%s247 + $0x48] sm:$0xff]
      %v266 = vld [vmem:[%s247 + $0x50] sm:$0xff]
      %v267 = vld [vmem:[%s247 + $0x58] sm:$0xff]
      %v268 = vld [vmem:[%s247 + $0x60] sm:$0xff]
      %v269 = vld [vmem:[%s247 + $0x68] sm:$0xff]
      %v270 = vld [vmem:[%s247 + $0x70] sm:$0xff]
      %v271 = vld [vmem:[%s247 + $0x78] sm:$0xff]
      %v272 = vpack.c.bf16 %v257, %v256
      %v273 = vpack.c.bf16 %v259, %v258
      %v274 = vpack.c.bf16 %v261, %v260
      %v275 = vpack.c.bf16 %v263, %v262
      %v276 = vpack.c.bf16 %v265, %v264
      %v277 = vpack.c.bf16 %v267, %v266
      %v278 = vpack.c.bf16 %v269, %v268
      %v279 = vpack.c.bf16 %v271, %v270
      %v280 = vld [vmem:[%s1] sm:$0xff]
      %v281 = vld [vmem:[%s1 + $0x8] sm:$0xff]
      %v282 = vld [vmem:[%s1 + $0x10] sm:$0xff]
      %v283 = vld [vmem:[%s1 + $0x18] sm:$0xff]
      %v284 = vpack.c.bf16 %v281, %v280
      %v285 = vpack.c.bf16 %v283, %v282
      %v286 = vld [vmem:[%s2] sm:$0x1]
      %v288 = vlaneseq
      %v289 = vshrl.u32 %v288, 7
      %v290 = vsub.s32 0, %v289
      %v291 = vrot.slane %v286, %v290
      %vm293 = vcmask 261120
      %v295 = vsel %vm293, %v272, 0
      %v298 = vsel %vm293, %v273, 0
      %v301 = vsel %vm293, %v274, 0
      %v304 = vsel %vm293, %v275, 0
      %v307 = vsel %vm293, %v276, 0
      %v310 = vsel %vm293, %v277, 0
      %v313 = vsel %vm293, %v278, 0
      %v316 = vsel %vm293, %v279, 0
      %318 = vmatprep.subr.bf16.mxu0 0
      %319 = vmatpush1.bf16.msra.mxu0 %v284
      %320 = vmatprep.subr.bf16.mxu0 0
      %321 = vmatpush1.bf16.msra.mxu0 %v285
      %322 = vmatprep.subr.bf16.mxu0 0
      %323 = vmatpush1.bf16.msra.mxu0 0
      %324 = vmatprep.subr.bf16.mxu0 0
      %325 = vmatpush1.bf16.msra.mxu0 0
      %326 = vmatprep.subr.bf16.mxu0 0
      %327 = vmatpush1.bf16.msra.mxu0 0
      %328 = vmatprep.subr.bf16.mxu0 0
      %329 = vmatpush1.bf16.msra.mxu0 0
      %330 = vmatprep.subr.bf16.mxu0 0
      %331 = vmatpush1.bf16.msra.mxu0 0
      %332 = vmatprep.subr.bf16.mxu0 0
      %333 = vmatpush1.bf16.msra.mxu0 0
      %334 = vmatprep.subr.bf16.mxu0 0
      %335 = vmatpush1.bf16.msra.mxu0 0
      %336 = vmatprep.subr.bf16.mxu0 0
      %337 = vmatpush1.bf16.msra.mxu0 0
      %338 = vmatprep.subr.bf16.mxu0 0
      %339 = vmatpush1.bf16.msra.mxu0 0
      %340 = vmatprep.subr.bf16.mxu0 0
      %341 = vmatpush1.bf16.msra.mxu0 0
      %342 = vmatprep.subr.bf16.mxu0 0
      %343 = vmatpush1.bf16.msra.mxu0 0
      %344 = vmatprep.subr.bf16.mxu0 0
      %345 = vmatpush1.bf16.msra.mxu0 0
      %346 = vmatprep.subr.bf16.mxu0 0
      %347 = vmatpush1.bf16.msra.mxu0 0
      %348 = vmatprep.subr.bf16.mxu0 0
      %349 = vmatpush1.bf16.msra.mxu0 0
      %350 = vmatprep.mubr.bf16.mxu0 0
      %351 = vmatmul.mubr.bf16.gmra.mrb[0].mxu0 %v295
      %v352 = vpop.f32.mrb[0].mxu0
      %v353 = vadd.f32 %v291, %v352
      %v354 = vpop.f32.mrb[0].mxu0
      %v355 = vpop.f32.mrb[0].mxu0
      %v356 = vadd.f32 %v291, %v355
      %v357 = vpop.f32.mrb[0].mxu0
      %358 = vmatprep.mubr.bf16.mxu0 0
      %359 = vmatmul.mubr.bf16.gmra.mrb[0].mxu0 %v298
      %v360 = vpop.f32.mrb[0].mxu0
      %v361 = vadd.f32 %v291, %v360
      %v362 = vpop.f32.mrb[0].mxu0
      %v363 = vpop.f32.mrb[0].mxu0
      %v364 = vadd.f32 %v291, %v363
      %v365 = vpop.f32.mrb[0].mxu0
      %366 = vmatprep.mubr.bf16.mxu0 0
      %367 = vmatmul.mubr.bf16.gmra.mrb[0].mxu0 %v301
      %v368 = vpop.f32.mrb[0].mxu0
      %v369 = vadd.f32 %v291, %v368
      %v370 = vpop.f32.mrb[0].mxu0
      %v371 = vpop.f32.mrb[0].mxu0
      %v372 = vadd.f32 %v291, %v371
      %v373 = vpop.f32.mrb[0].mxu0
      %374 = vmatprep.mubr.bf16.mxu0 0
      %375 = vmatmul.mubr.bf16.gmra.mrb[0].mxu0 %v304
      %v376 = vpop.f32.mrb[0].mxu0
      %v377 = vadd.f32 %v291, %v376
      %v378 = vpop.f32.mrb[0].mxu0
      %v379 = vpop.f32.mrb[0].mxu0
      %v380 = vadd.f32 %v291, %v379
      %v381 = vpop.f32.mrb[0].mxu0
      %382 = vmatprep.mubr.bf16.mxu0 0
      %383 = vmatmul.mubr.bf16.gmra.mrb[0].mxu0 %v307
      %v384 = vpop.f32.mrb[0].mxu0
      %v385 = vadd.f32 %v291, %v384
      %v386 = vpop.f32.mrb[0].mxu0
      %v387 = vpop.f32.mrb[0].mxu0
      %v388 = vadd.f32 %v291, %v387
      %v389 = vpop.f32.mrb[0].mxu0
      %390 = vmatprep.mubr.bf16.mxu0 0
      %391 = vmatmul.mubr.bf16.gmra.mrb[0].mxu0 %v310
      %v392 = vpop.f32.mrb[0].mxu0
      %v393 = vadd.f32 %v291, %v392
      %v394 = vpop.f32.mrb[0].mxu0
      %v395 = vpop.f32.mrb[0].mxu0
      %v396 = vadd.f32 %v291, %v395
      %v397 = vpop.f32.mrb[0].mxu0
      %398 = vmatprep.mubr.bf16.mxu0 0
      %399 = vmatmul.mubr.bf16.gmra.mrb[0].mxu0 %v313
      %v400 = vpop.f32.mrb[0].mxu0
      %v401 = vadd.f32 %v291, %v400
      %v402 = vpop.f32.mrb[0].mxu0
      %v403 = vpop.f32.mrb[0].mxu0
      %v404 = vadd.f32 %v291, %v403
      %v405 = vpop.f32.mrb[0].mxu0
      %406 = vmatprep.mubr.bf16.mxu0 0
      %407 = vmatmul.mubr.bf16.gmra.mrb[0].mxu0 %v316
      %v408 = vpop.f32.mrb[0].mxu0
      %v409 = vadd.f32 %v291, %v408
      %v410 = vpop.f32.mrb[0].mxu0
      %v411 = vpop.f32.mrb[0].mxu0
      %v412 = vadd.f32 %v291, %v411
      %v413 = vpop.f32.mrb[0].mxu0
      %414 = vdwg.mxu0
      %v415 = vmul.f32 %v353, 0.35355338
      %v416 = vmul.f32 %v356, 0.35355338
      %v417 = vmul.f32 %v361, 0.35355338
      %v418 = vmul.f32 %v364, 0.35355338
      %v419 = vmul.f32 %v369, 0.35355338
      %v420 = vmul.f32 %v372, 0.35355338
      %v421 = vmul.f32 %v377, 0.35355338
      %v422 = vmul.f32 %v380, 0.35355338
      %v423 = vmul.f32 %v385, 0.35355338
      %v424 = vmul.f32 %v388, 0.35355338
      %v425 = vmul.f32 %v393, 0.35355338
      %v426 = vmul.f32 %v396, 0.35355338
      %v427 = vmul.f32 %v401, 0.35355338
      %v428 = vmul.f32 %v404, 0.35355338
      %v429 = vmul.f32 %v409, 0.35355338
      %v430 = vmul.f32 %v412, 0.35355338
      %v431 = vpack.c.bf16 %v416, %v415
      %v432 = vpack.c.bf16 %v418, %v417
      %v433 = vpack.c.bf16 %v420, %v419
      %v434 = vpack.c.bf16 %v422, %v421
      %v435 = vpack.c.bf16 %v424, %v423
      %v436 = vpack.c.bf16 %v426, %v425
      %v437 = vpack.c.bf16 %v428, %v427
      %v438 = vpack.c.bf16 %v430, %v429
      %v439 = vpack.c.bf16 %v356, %v353
      %v440 = vpack.c.bf16 %v364, %v361
      %v441 = vpack.c.bf16 %v372, %v369
      %v442 = vpack.c.bf16 %v380, %v377
      %v443 = vpack.c.bf16 %v388, %v385
      %v444 = vpack.c.bf16 %v396, %v393
      %v445 = vpack.c.bf16 %v404, %v401
      %v446 = vpack.c.bf16 %v412, %v409
      %v447 = vld [vmem:[%s5] sm:$0xf]
      %v448 = vld [vmem:[%s5 + $0x4] sm:$0xf]
      %v449 = vld [vmem:[%s5 + $0x8] sm:$0xf]
      %v450 = vld [vmem:[%s5 + $0xc] sm:$0xf]
      %v451 = vld [vmem:[%s5 + $0x10] sm:$0xf]
      %v452 = vld [vmem:[%s5 + $0x14] sm:$0xf]
      %v453 = vld [vmem:[%s5 + $0x18] sm:$0xf]
      %v454 = vld [vmem:[%s5 + $0x1c] sm:$0xf]
      %v455 = vld [vmem:[%s5 + $0x20] sm:$0xf]
      %v456 = vld [vmem:[%s5 + $0x24] sm:$0xf]
      %v457 = vld [vmem:[%s5 + $0x28] sm:$0xf]
      %v458 = vld [vmem:[%s5 + $0x2c] sm:$0xf]
      %v459 = vld [vmem:[%s5 + $0x30] sm:$0xf]
      %v460 = vld [vmem:[%s5 + $0x34] sm:$0xf]
      %v461 = vld [vmem:[%s5 + $0x38] sm:$0xf]
      %v462 = vld [vmem:[%s5 + $0x3c] sm:$0xf]
      %v463 = vunpack.c.l.bf16 %v447
      %v464 = vunpack.c.l.bf16 %v448
      %v465 = vunpack.c.l.bf16 %v449
      %v466 = vunpack.c.l.bf16 %v450
      %v467 = vunpack.c.l.bf16 %v451
      %v468 = vunpack.c.l.bf16 %v452
      %v469 = vunpack.c.l.bf16 %v453
      %v470 = vunpack.c.l.bf16 %v454
      %v471 = vunpack.c.l.bf16 %v455
      %v472 = vunpack.c.l.bf16 %v456
      %v473 = vunpack.c.l.bf16 %v457
      %v474 = vunpack.c.l.bf16 %v458
      %v475 = vunpack.c.l.bf16 %v459
      %v476 = vunpack.c.l.bf16 %v460
      %v477 = vunpack.c.l.bf16 %v461
      %v478 = vunpack.c.l.bf16 %v462
      %487 = vrot.lane.b32.xlu0 %v439, 96
      %v488 = vpop.permute.xlu0 %487
      %489 = vrot.lane.b32.xlu0 %v440, 96
      %v490 = vpop.permute.xlu0 %489
      %491 = vrot.lane.b32.xlu0 %v441, 96
      %v492 = vpop.permute.xlu0 %491
      %493 = vrot.lane.b32.xlu0 %v442, 96
      %v494 = vpop.permute.xlu0 %493
      %495 = vrot.lane.b32.xlu0 %v443, 96
      %v496 = vpop.permute.xlu0 %495
      %497 = vrot.lane.b32.xlu0 %v444, 96
      %v498 = vpop.permute.xlu0 %497
      %499 = vrot.lane.b32.xlu0 %v445, 96
      %v500 = vpop.permute.xlu0 %499
      %501 = vrot.lane.b32.xlu0 %v446, 96
      %v502 = vpop.permute.xlu0 %501
      %vm503 = vcmask 64512
      %v505 = vsel %vm503, %v431, 0
      %v508 = vsel %vm503, %v432, 0
      %v511 = vsel %vm503, %v433, 0
      %v514 = vsel %vm503, %v434, 0
      %v517 = vsel %vm503, %v435, 0
      %v520 = vsel %vm503, %v436, 0
      %v523 = vsel %vm503, %v437, 0
      %v526 = vsel %vm503, %v438, 0
      %v529 = vsel %vm503, %v488, 0
      %v532 = vsel %vm503, %v490, 0
      %v535 = vsel %vm503, %v492, 0
      %v538 = vsel %vm503, %v494, 0
      %v541 = vsel %vm503, %v496, 0
      %v544 = vsel %vm503, %v498, 0
      %v547 = vsel %vm503, %v500, 0
      %v550 = vsel %vm503, %v502, 0
      %552 = vmatprep.subr.bf16.mxu0 0
      %553 = vmatpush1.bf16.xpose.msra.mxu0 %v529
      %554 = vmatprep.subr.bf16.mxu0 0
      %555 = vmatpush1.bf16.xpose.msra.mxu0 %v532
      %556 = vmatprep.subr.bf16.mxu0 0
      %557 = vmatpush1.bf16.xpose.msra.mxu0 %v535
      %558 = vmatprep.subr.bf16.mxu0 0
      %559 = vmatpush1.bf16.xpose.msra.mxu0 %v538
      %560 = vmatprep.subr.bf16.mxu0 0
      %561 = vmatpush1.bf16.xpose.msra.mxu0 %v541
      %562 = vmatprep.subr.bf16.mxu0 0
      %563 = vmatpush1.bf16.xpose.msra.mxu0 %v544
      %564 = vmatprep.subr.bf16.mxu0 0
      %565 = vmatpush1.bf16.xpose.msra.mxu0 %v547
      %566 = vmatprep.subr.bf16.mxu0 0
      %567 = vmatpush1.bf16.xpose.msra.mxu0 %v550
      %568 = vmatprep.subr.bf16.mxu0 0
      %569 = vmatpush1.bf16.xpose.msra.mxu0 0
      %570 = vmatprep.subr.bf16.mxu0 0
      %571 = vmatpush1.bf16.xpose.msra.mxu0 0
      %572 = vmatprep.subr.bf16.mxu0 0
      %573 = vmatpush1.bf16.xpose.msra.mxu0 0
      %574 = vmatprep.subr.bf16.mxu0 0
      %575 = vmatpush1.bf16.xpose.msra.mxu0 0
      %576 = vmatprep.subr.bf16.mxu0 0
      %577 = vmatpush1.bf16.xpose.msra.mxu0 0
      %578 = vmatprep.subr.bf16.mxu0 0
      %579 = vmatpush1.bf16.xpose.msra.mxu0 0
      %580 = vmatprep.subr.bf16.mxu0 0
      %581 = vmatpush1.bf16.xpose.msra.mxu0 0
      %582 = vmatprep.subr.bf16.mxu0 0
      %583 = vmatpush1.bf16.xpose.msra.mxu0 0
      %584 = vmatprep.mubr.bf16.mxu0 0
      %585 = vmatmul.mubr.bf16.gmra.mrb[0].mxu0 %v505
      %v586 = vpop.f32.mrb[0].mxu0
      %v587 = vadd.f32 %v463, %v586
      %v588 = vpop.f32.mrb[0].mxu0
      %v589 = vpop.f32.mrb[0].mxu0
      %v590 = vadd.f32 %v464, %v589
      %v591 = vpop.f32.mrb[0].mxu0
      %592 = vmatprep.mubr.bf16.mxu0 0
      %593 = vmatmul.mubr.bf16.gmra.mrb[0].mxu0 %v508
      %v594 = vpop.f32.mrb[0].mxu0
      %v595 = vadd.f32 %v465, %v594
      %v596 = vpop.f32.mrb[0].mxu0
      %v597 = vpop.f32.mrb[0].mxu0
      %v598 = vadd.f32 %v466, %v597
      %v599 = vpop.f32.mrb[0].mxu0
      %600 = vmatprep.mubr.bf16.mxu0 0
      %601 = vmatmul.mubr.bf16.gmra.mrb[0].mxu0 %v511
      %v602 = vpop.f32.mrb[0].mxu0
      %v603 = vadd.f32 %v467, %v602
      %v604 = vpop.f32.mrb[0].mxu0
      %v605 = vpop.f32.mrb[0].mxu0
      %v606 = vadd.f32 %v468, %v605
      %v607 = vpop.f32.mrb[0].mxu0
      %608 = vmatprep.mubr.bf16.mxu0 0
      %609 = vmatmul.mubr.bf16.gmra.mrb[0].mxu0 %v514
      %v610 = vpop.f32.mrb[0].mxu0
      %v611 = vadd.f32 %v469, %v610
      %v612 = vpop.f32.mrb[0].mxu0
      %v613 = vpop.f32.mrb[0].mxu0
      %v614 = vadd.f32 %v470, %v613
      %v615 = vpop.f32.mrb[0].mxu0
      %616 = vmatprep.mubr.bf16.mxu0 0
      %617 = vmatmul.mubr.bf16.gmra.mrb[0].mxu0 %v517
      %v618 = vpop.f32.mrb[0].mxu0
      %v619 = vadd.f32 %v471, %v618
      %v620 = vpop.f32.mrb[0].mxu0
      %v621 = vpop.f32.mrb[0].mxu0
      %v622 = vadd.f32 %v472, %v621
      %v623 = vpop.f32.mrb[0].mxu0
      %624 = vmatprep.mubr.bf16.mxu0 0
      %625 = vmatmul.mubr.bf16.gmra.mrb[0].mxu0 %v520
      %v626 = vpop.f32.mrb[0].mxu0
      %v627 = vadd.f32 %v473, %v626
      %v628 = vpop.f32.mrb[0].mxu0
      %v629 = vpop.f32.mrb[0].mxu0
      %v630 = vadd.f32 %v474, %v629
      %v631 = vpop.f32.mrb[0].mxu0
      %632 = vmatprep.mubr.bf16.mxu0 0
      %633 = vmatmul.mubr.bf16.gmra.mrb[0].mxu0 %v523
      %v634 = vpop.f32.mrb[0].mxu0
      %v635 = vadd.f32 %v475, %v634
      %v636 = vpop.f32.mrb[0].mxu0
      %v637 = vpop.f32.mrb[0].mxu0
      %v638 = vadd.f32 %v476, %v637
      %v639 = vpop.f32.mrb[0].mxu0
      %640 = vmatprep.mubr.bf16.mxu0 0
      %641 = vmatmul.mubr.bf16.gmra.mrb[0].mxu0 %v526
      %v642 = vpop.f32.mrb[0].mxu0
      %v643 = vadd.f32 %v477, %v642
      %v644 = vpop.f32.mrb[0].mxu0
      %v645 = vpop.f32.mrb[0].mxu0
      %v646 = vadd.f32 %v478, %v645
      %v647 = vpop.f32.mrb[0].mxu0
      %648 = vdwg.mxu0
      %649 = vmax.xlane.f32.xlu0 %v587
      %v650 = vpop.xlane.xlu0 %649
      %651 = vmax.xlane.f32.xlu0 %v590
      %v652 = vpop.xlane.xlu0 %651
      %653 = vmax.xlane.f32.xlu0 %v595
      %v654 = vpop.xlane.xlu0 %653
      %655 = vmax.xlane.f32.xlu0 %v598
      %v656 = vpop.xlane.xlu0 %655
      %657 = vmax.xlane.f32.xlu0 %v603
      %v658 = vpop.xlane.xlu0 %657
      %659 = vmax.xlane.f32.xlu0 %v606
      %v660 = vpop.xlane.xlu0 %659
      %661 = vmax.xlane.f32.xlu0 %v611
      %v662 = vpop.xlane.xlu0 %661
      %663 = vmax.xlane.f32.xlu0 %v614
      %v664 = vpop.xlane.xlu0 %663
      %665 = vmax.xlane.f32.xlu0 %v619
      %v666 = vpop.xlane.xlu0 %665
      %667 = vmax.xlane.f32.xlu0 %v622
      %v668 = vpop.xlane.xlu0 %667
      %669 = vmax.xlane.f32.xlu0 %v627
      %v670 = vpop.xlane.xlu0 %669
      %671 = vmax.xlane.f32.xlu0 %v630
      %v672 = vpop.xlane.xlu0 %671
      %673 = vmax.xlane.f32.xlu0 %v635
      %v674 = vpop.xlane.xlu0 %673
      %675 = vmax.xlane.f32.xlu0 %v638
      %v676 = vpop.xlane.xlu0 %675
      %677 = vmax.xlane.f32.xlu0 %v643
      %v678 = vpop.xlane.xlu0 %677
      %679 = vmax.xlane.f32.xlu0 %v646
      %v680 = vpop.xlane.xlu0 %679
      %v681 = vsub.f32 %v587, %v650
      %v682 = vsub.f32 %v590, %v652
      %v683 = vsub.f32 %v595, %v654
      %v684 = vsub.f32 %v598, %v656
      %v685 = vsub.f32 %v603, %v658
      %v686 = vsub.f32 %v606, %v660
      %v687 = vsub.f32 %v611, %v662
      %v688 = vsub.f32 %v614, %v664
      %v689 = vsub.f32 %v619, %v666
      %v690 = vsub.f32 %v622, %v668
      %v691 = vsub.f32 %v627, %v670
      %v692 = vsub.f32 %v630, %v672
      %v693 = vsub.f32 %v635, %v674
      %v694 = vsub.f32 %v638, %v676
      %v695 = vsub.f32 %v643, %v678
      %v696 = vsub.f32 %v646, %v680
      %v697 = vmul.f32 %v681, 1.442695
      %v698 = vpow.pop %v697
      %v699 = vmul.f32 %v682, 1.442695
      %v700 = vpow.pop %v699
      %v701 = vmul.f32 %v683, 1.442695
      %v702 = vpow.pop %v701
      %v703 = vmul.f32 %v684, 1.442695
      %v704 = vpow.pop %v703
      %v705 = vmul.f32 %v685, 1.442695
      %v706 = vpow.pop %v705
      %v707 = vmul.f32 %v686, 1.442695
      %v708 = vpow.pop %v707
      %v709 = vmul.f32 %v687, 1.442695
      %v710 = vpow.pop %v709
      %v711 = vmul.f32 %v688, 1.442695
      %v712 = vpow.pop %v711
      %v713 = vmul.f32 %v689, 1.442695
      %v714 = vpow.pop %v713
      %v715 = vmul.f32 %v690, 1.442695
      %v716 = vpow.pop %v715
      %v717 = vmul.f32 %v691, 1.442695
      %v718 = vpow.pop %v717
      %v719 = vmul.f32 %v692, 1.442695
      %v720 = vpow.pop %v719
      %v721 = vmul.f32 %v693, 1.442695
      %v722 = vpow.pop %v721
      %v723 = vmul.f32 %v694, 1.442695
      %v724 = vpow.pop %v723
      %v725 = vmul.f32 %v695, 1.442695
      %v726 = vpow.pop %v725
      %v727 = vmul.f32 %v696, 1.442695
      %v728 = vpow.pop %v727
      %729 = vadd.xlane.f32.xlu0 %v698
      %v730 = vpop.xlane.xlu0 %729
      %731 = vadd.xlane.f32.xlu0 %v700
      %v732 = vpop.xlane.xlu0 %731
      %733 = vadd.xlane.f32.xlu0 %v702
      %v734 = vpop.xlane.xlu0 %733
      %735 = vadd.xlane.f32.xlu0 %v704
      %v736 = vpop.xlane.xlu0 %735
      %737 = vadd.xlane.f32.xlu0 %v706
      %v738 = vpop.xlane.xlu0 %737
      %739 = vadd.xlane.f32.xlu0 %v708
      %v740 = vpop.xlane.xlu0 %739
      %741 = vadd.xlane.f32.xlu0 %v710
      %v742 = vpop.xlane.xlu0 %741
      %743 = vadd.xlane.f32.xlu0 %v712
      %v744 = vpop.xlane.xlu0 %743
      %745 = vadd.xlane.f32.xlu0 %v714
      %v746 = vpop.xlane.xlu0 %745
      %747 = vadd.xlane.f32.xlu0 %v716
      %v748 = vpop.xlane.xlu0 %747
      %749 = vadd.xlane.f32.xlu0 %v718
      %v750 = vpop.xlane.xlu0 %749
      %751 = vadd.xlane.f32.xlu0 %v720
      %v752 = vpop.xlane.xlu0 %751
      %753 = vadd.xlane.f32.xlu0 %v722
      %v754 = vpop.xlane.xlu0 %753
      %755 = vadd.xlane.f32.xlu0 %v724
      %v756 = vpop.xlane.xlu0 %755
      %757 = vadd.xlane.f32.xlu0 %v726
      %v758 = vpop.xlane.xlu0 %757
      %759 = vadd.xlane.f32.xlu0 %v728
      %v760 = vpop.xlane.xlu0 %759
      %v761 = vrcp.pop %v730
      %v762 = vrcp.pop %v732
      %v763 = vrcp.pop %v734
      %v764 = vrcp.pop %v736
      %v765 = vrcp.pop %v738
      %v766 = vrcp.pop %v740
      %v767 = vrcp.pop %v742
      %v768 = vrcp.pop %v744
      %v769 = vrcp.pop %v746
      %v770 = vrcp.pop %v748
      %v771 = vrcp.pop %v750
      %v772 = vrcp.pop %v752
      %v773 = vrcp.pop %v754
      %v774 = vrcp.pop %v756
      %v775 = vrcp.pop %v758
      %v776 = vrcp.pop %v760
      %v777 = vpack.c.bf16 %v700, %v698
      %v778 = vpack.c.bf16 %v704, %v702
      %v779 = vpack.c.bf16 %v708, %v706
      %v780 = vpack.c.bf16 %v712, %v710
      %v781 = vpack.c.bf16 %v716, %v714
      %v782 = vpack.c.bf16 %v720, %v718
      %v783 = vpack.c.bf16 %v724, %v722
      %v784 = vpack.c.bf16 %v728, %v726
      %785 = vrot.lane.b32.xlu0 %v439, 64
      %v786 = vpop.permute.xlu0 %785
      %787 = vrot.lane.b32.xlu0 %v440, 64
      %v788 = vpop.permute.xlu0 %787
      %789 = vrot.lane.b32.xlu0 %v441, 64
      %v790 = vpop.permute.xlu0 %789
      %791 = vrot.lane.b32.xlu0 %v442, 64
      %v792 = vpop.permute.xlu0 %791
      %793 = vrot.lane.b32.xlu0 %v443, 64
      %v794 = vpop.permute.xlu0 %793
      %795 = vrot.lane.b32.xlu0 %v444, 64
      %v796 = vpop.permute.xlu0 %795
      %797 = vrot.lane.b32.xlu0 %v445, 64
      %v798 = vpop.permute.xlu0 %797
      %799 = vrot.lane.b32.xlu0 %v446, 64
      %v800 = vpop.permute.xlu0 %799
      %809 = vmatprep.subr.bf16.mxu0 0
      %810 = vmatpush1.bf16.msra.mxu0 %v786
      %811 = vmatprep.subr.bf16.mxu0 0
      %812 = vmatpush1.bf16.msra.mxu0 %v788
      %813 = vmatprep.subr.bf16.mxu0 0
      %814 = vmatpush1.bf16.msra.mxu0 %v790
      %815 = vmatprep.subr.bf16.mxu0 0
      %816 = vmatpush1.bf16.msra.mxu0 %v792
      %817 = vmatprep.subr.bf16.mxu0 0
      %818 = vmatpush1.bf16.msra.mxu0 %v794
      %819 = vmatprep.subr.bf16.mxu0 0
      %820 = vmatpush1.bf16.msra.mxu0 %v796
      %821 = vmatprep.subr.bf16.mxu0 0
      %822 = vmatpush1.bf16.msra.mxu0 %v798
      %823 = vmatprep.subr.bf16.mxu0 0
      %824 = vmatpush1.bf16.msra.mxu0 %v800
      %825 = vmatprep.subr.bf16.mxu0 0
      %826 = vmatpush1.bf16.msra.mxu0 0
      %827 = vmatprep.subr.bf16.mxu0 0
      %828 = vmatpush1.bf16.msra.mxu0 0
      %829 = vmatprep.subr.bf16.mxu0 0
      %830 = vmatpush1.bf16.msra.mxu0 0
      %831 = vmatprep.subr.bf16.mxu0 0
      %832 = vmatpush1.bf16.msra.mxu0 0
      %833 = vmatprep.subr.bf16.mxu0 0
      %834 = vmatpush1.bf16.msra.mxu0 0
      %835 = vmatprep.subr.bf16.mxu0 0
      %836 = vmatpush1.bf16.msra.mxu0 0
      %837 = vmatprep.subr.bf16.mxu0 0
      %838 = vmatpush1.bf16.msra.mxu0 0
      %839 = vmatprep.subr.bf16.mxu0 0
      %840 = vmatpush1.bf16.msra.mxu0 0
      %841 = vmatprep.mubr.bf16.mxu0 0
      %842 = vmatmul.mubr.bf16.gmra.mrb[0].mxu0 %v777
      %v843 = vpop.f32.mrb[0].mxu0
      %v844 = vadd.f32 0.0, %v843
      %v845 = vpop.f32.mrb[0].mxu0
      %v846 = vpop.f32.mrb[0].mxu0
      %v847 = vadd.f32 0.0, %v846
      %v848 = vpop.f32.mrb[0].mxu0
      %849 = vmatprep.mubr.bf16.mxu0 0
      %850 = vmatmul.mubr.bf16.gmra.mrb[0].mxu0 %v778
      %v851 = vpop.f32.mrb[0].mxu0
      %v852 = vadd.f32 0.0, %v851
      %v853 = vpop.f32.mrb[0].mxu0
      %v854 = vpop.f32.mrb[0].mxu0
      %v855 = vadd.f32 0.0, %v854
      %v856 = vpop.f32.mrb[0].mxu0
      %857 = vmatprep.mubr.bf16.mxu0 0
      %858 = vmatmul.mubr.bf16.gmra.mrb[0].mxu0 %v779
      %v859 = vpop.f32.mrb[0].mxu0
      %v860 = vadd.f32 0.0, %v859
      %v861 = vpop.f32.mrb[0].mxu0
      %v862 = vpop.f32.mrb[0].mxu0
      %v863 = vadd.f32 0.0, %v862
      %v864 = vpop.f32.mrb[0].mxu0
      %865 = vmatprep.mubr.bf16.mxu0 0
      %866 = vmatmul.mubr.bf16.gmra.mrb[0].mxu0 %v780
      %v867 = vpop.f32.mrb[0].mxu0
      %v868 = vadd.f32 0.0, %v867
      %v869 = vpop.f32.mrb[0].mxu0
      %v870 = vpop.f32.mrb[0].mxu0
      %v871 = vadd.f32 0.0, %v870
      %v872 = vpop.f32.mrb[0].mxu0
      %873 = vmatprep.mubr.bf16.mxu0 0
      %874 = vmatmul.mubr.bf16.gmra.mrb[0].mxu0 %v781
      %v875 = vpop.f32.mrb[0].mxu0
      %v876 = vadd.f32 0.0, %v875
      %v877 = vpop.f32.mrb[0].mxu0
      %v878 = vpop.f32.mrb[0].mxu0
      %v879 = vadd.f32 0.0, %v878
      %v880 = vpop.f32.mrb[0].mxu0
      %881 = vmatprep.mubr.bf16.mxu0 0
      %882 = vmatmul.mubr.bf16.gmra.mrb[0].mxu0 %v782
      %v883 = vpop.f32.mrb[0].mxu0
      %v884 = vadd.f32 0.0, %v883
      %v885 = vpop.f32.mrb[0].mxu0
      %v886 = vpop.f32.mrb[0].mxu0
      %v887 = vadd.f32 0.0, %v886
      %v888 = vpop.f32.mrb[0].mxu0
      %889 = vmatprep.mubr.bf16.mxu0 0
      %890 = vmatmul.mubr.bf16.gmra.mrb[0].mxu0 %v783
      %v891 = vpop.f32.mrb[0].mxu0
      %v892 = vadd.f32 0.0, %v891
      %v893 = vpop.f32.mrb[0].mxu0
      %v894 = vpop.f32.mrb[0].mxu0
      %v895 = vadd.f32 0.0, %v894
      %v896 = vpop.f32.mrb[0].mxu0
      %897 = vmatprep.mubr.bf16.mxu0 0
      %898 = vmatmul.mubr.bf16.gmra.mrb[0].mxu0 %v784
      %v899 = vpop.f32.mrb[0].mxu0
      %v900 = vadd.f32 0.0, %v899
      %v901 = vpop.f32.mrb[0].mxu0
      %v902 = vpop.f32.mrb[0].mxu0
      %v903 = vadd.f32 0.0, %v902
      %v904 = vpop.f32.mrb[0].mxu0
      %905 = vdwg.mxu0
      %v906 = vmul.f32 %v844, %v761
      %v907 = vmul.f32 %v847, %v762
      %v908 = vmul.f32 %v852, %v763
      %v909 = vmul.f32 %v855, %v764
      %v910 = vmul.f32 %v860, %v765
      %v911 = vmul.f32 %v863, %v766
      %v912 = vmul.f32 %v868, %v767
      %v913 = vmul.f32 %v871, %v768
      %v914 = vmul.f32 %v876, %v769
      %v915 = vmul.f32 %v879, %v770
      %v916 = vmul.f32 %v884, %v771
      %v917 = vmul.f32 %v887, %v772
      %v918 = vmul.f32 %v892, %v773
      %v919 = vmul.f32 %v895, %v774
      %v920 = vmul.f32 %v900, %v775
      %v921 = vmul.f32 %v903, %v776
      %s922 = scalar_lea.vmem %s5, 64
      %v923 = vld [vmem:[%s922] sm:$0xf]
      %v924 = vld [vmem:[%s922 + $0x4] sm:$0xf]
      %v925 = vld [vmem:[%s922 + $0x8] sm:$0xf]
      %v926 = vld [vmem:[%s922 + $0xc] sm:$0xf]
      %v927 = vld [vmem:[%s922 + $0x10] sm:$0xf]
      %v928 = vld [vmem:[%s922 + $0x14] sm:$0xf]
      %v929 = vld [vmem:[%s922 + $0x18] sm:$0xf]
      %v930 = vld [vmem:[%s922 + $0x1c] sm:$0xf]
      %v931 = vld [vmem:[%s922 + $0x20] sm:$0xf]
      %v932 = vld [vmem:[%s922 + $0x24] sm:$0xf]
      %v933 = vld [vmem:[%s922 + $0x28] sm:$0xf]
      %v934 = vld [vmem:[%s922 + $0x2c] sm:$0xf]
      %v935 = vld [vmem:[%s922 + $0x30] sm:$0xf]
      %v936 = vld [vmem:[%s922 + $0x34] sm:$0xf]
      %v937 = vld [vmem:[%s922 + $0x38] sm:$0xf]
      %v938 = vld [vmem:[%s922 + $0x3c] sm:$0xf]
      %v939 = vunpack.c.l.bf16 %v923
      %v940 = vunpack.c.l.bf16 %v924
      %v941 = vunpack.c.l.bf16 %v925
      %v942 = vunpack.c.l.bf16 %v926
      %v943 = vunpack.c.l.bf16 %v927
      %v944 = vunpack.c.l.bf16 %v928
      %v945 = vunpack.c.l.bf16 %v929
      %v946 = vunpack.c.l.bf16 %v930
      %v947 = vunpack.c.l.bf16 %v931
      %v948 = vunpack.c.l.bf16 %v932
      %v949 = vunpack.c.l.bf16 %v933
      %v950 = vunpack.c.l.bf16 %v934
      %v951 = vunpack.c.l.bf16 %v935
      %v952 = vunpack.c.l.bf16 %v936
      %v953 = vunpack.c.l.bf16 %v937
      %v954 = vunpack.c.l.bf16 %v938
      %963 = vrot.lane.b32.xlu0 %v431, 120
      %v964 = vpop.permute.xlu0 %963
      %965 = vrot.lane.b32.xlu0 %v432, 120
      %v966 = vpop.permute.xlu0 %965
      %967 = vrot.lane.b32.xlu0 %v433, 120
      %v968 = vpop.permute.xlu0 %967
      %969 = vrot.lane.b32.xlu0 %v434, 120
      %v970 = vpop.permute.xlu0 %969
      %971 = vrot.lane.b32.xlu0 %v435, 120
      %v972 = vpop.permute.xlu0 %971
      %973 = vrot.lane.b32.xlu0 %v436, 120
      %v974 = vpop.permute.xlu0 %973
      %975 = vrot.lane.b32.xlu0 %v437, 120
      %v976 = vpop.permute.xlu0 %975
      %977 = vrot.lane.b32.xlu0 %v438, 120
      %v978 = vpop.permute.xlu0 %977
      %979 = vrot.lane.b32.xlu0 %v439, 88
      %v980 = vpop.permute.xlu0 %979
      %981 = vrot.lane.b32.xlu0 %v440, 88
      %v982 = vpop.permute.xlu0 %981
      %983 = vrot.lane.b32.xlu0 %v441, 88
      %v984 = vpop.permute.xlu0 %983
      %985 = vrot.lane.b32.xlu0 %v442, 88
      %v986 = vpop.permute.xlu0 %985
      %987 = vrot.lane.b32.xlu0 %v443, 88
      %v988 = vpop.permute.xlu0 %987
      %989 = vrot.lane.b32.xlu0 %v444, 88
      %v990 = vpop.permute.xlu0 %989
      %991 = vrot.lane.b32.xlu0 %v445, 88
      %v992 = vpop.permute.xlu0 %991
      %993 = vrot.lane.b32.xlu0 %v446, 88
      %v994 = vpop.permute.xlu0 %993
      %v996 = vsel %vm503, %v964, 0
      %v999 = vsel %vm503, %v966, 0
      %v1002 = vsel %vm503, %v968, 0
      %v1005 = vsel %vm503, %v970, 0
      %v1008 = vsel %vm503, %v972, 0
      %v1011 = vsel %vm503, %v974, 0
      %v1014 = vsel %vm503, %v976, 0
      %v1017 = vsel %vm503, %v978, 0
      %v1020 = vsel %vm503, %v980, 0
      %v1023 = vsel %vm503, %v982, 0
      %v1026 = vsel %vm503, %v984, 0
      %v1029 = vsel %vm503, %v986, 0
      %v1032 = vsel %vm503, %v988, 0
      %v1035 = vsel %vm503, %v990, 0
      %v1038 = vsel %vm503, %v992, 0
      %v1041 = vsel %vm503, %v994, 0
      %1043 = vmatprep.subr.bf16.mxu0 0
      %1044 = vmatpush1.bf16.xpose.msra.mxu0 %v1020
      %1045 = vmatprep.subr.bf16.mxu0 0
      %1046 = vmatpush1.bf16.xpose.msra.mxu0 %v1023
      %1047 = vmatprep.subr.bf16.mxu0 0
      %1048 = vmatpush1.bf16.xpose.msra.mxu0 %v1026
      %1049 = vmatprep.subr.bf16.mxu0 0
      %1050 = vmatpush1.bf16.xpose.msra.mxu0 %v1029
      %1051 = vmatprep.subr.bf16.mxu0 0
      %1052 = vmatpush1.bf16.xpose.msra.mxu0 %v1032
      %1053 = vmatprep.subr.bf16.mxu0 0
      %1054 = vmatpush1.bf16.xpose.msra.mxu0 %v1035
      %1055 = vmatprep.subr.bf16.mxu0 0
      %1056 = vmatpush1.bf16.xpose.msra.mxu0 %v1038
      %1057 = vmatprep.subr.bf16.mxu0 0
      %1058 = vmatpush1.bf16.xpose.msra.mxu0 %v1041
      %1059 = vmatprep.subr.bf16.mxu0 0
      %1060 = vmatpush1.bf16.xpose.msra.mxu0 0
      %1061 = vmatprep.subr.bf16.mxu0 0
      %1062 = vmatpush1.bf16.xpose.msra.mxu0 0
      %1063 = vmatprep.subr.bf16.mxu0 0
      %1064 = vmatpush1.bf16.xpose.msra.mxu0 0
      %1065 = vmatprep.subr.bf16.mxu0 0
      %1066 = vmatpush1.bf16.xpose.msra.mxu0 0
      %1067 = vmatprep.subr.bf16.mxu0 0
      %1068 = vmatpush1.bf16.xpose.msra.mxu0 0
      %1069 = vmatprep.subr.bf16.mxu0 0
      %1070 = vmatpush1.bf16.xpose.msra.mxu0 0
      %1071 = vmatprep.subr.bf16.mxu0 0
      %1072 = vmatpush1.bf16.xpose.msra.mxu0 0
      %1073 = vmatprep.subr.bf16.mxu0 0
      %1074 = vmatpush1.bf16.xpose.msra.mxu0 0
      %1075 = vmatprep.mubr.bf16.mxu0 0
      %1076 = vmatmul.mubr.bf16.gmra.mrb[0].mxu0 %v996
      %v1077 = vpop.f32.mrb[0].mxu0
      %v1078 = vadd.f32 %v939, %v1077
      %v1079 = vpop.f32.mrb[0].mxu0
      %v1080 = vpop.f32.mrb[0].mxu0
      %v1081 = vadd.f32 %v940, %v1080
      %v1082 = vpop.f32.mrb[0].mxu0
      %1083 = vmatprep.mubr.bf16.mxu0 0
      %1084 = vmatmul.mubr.bf16.gmra.mrb[0].mxu0 %v999
      %v1085 = vpop.f32.mrb[0].mxu0
      %v1086 = vadd.f32 %v941, %v1085
      %v1087 = vpop.f32.mrb[0].mxu0
      %v1088 = vpop.f32.mrb[0].mxu0
      %v1089 = vadd.f32 %v942, %v1088
      %v1090 = vpop.f32.mrb[0].mxu0
      %1091 = vmatprep.mubr.bf16.mxu0 0
      %1092 = vmatmul.mubr.bf16.gmra.mrb[0].mxu0 %v1002
      %v1093 = vpop.f32.mrb[0].mxu0
      %v1094 = vadd.f32 %v943, %v1093
      %v1095 = vpop.f32.mrb[0].mxu0
      %v1096 = vpop.f32.mrb[0].mxu0
      %v1097 = vadd.f32 %v944, %v1096
      %v1098 = vpop.f32.mrb[0].mxu0
      %1099 = vmatprep.mubr.bf16.mxu0 0
      %1100 = vmatmul.mubr.bf16.gmra.mrb[0].mxu0 %v1005
      %v1101 = vpop.f32.mrb[0].mxu0
      %v1102 = vadd.f32 %v945, %v1101
      %v1103 = vpop.f32.mrb[0].mxu0
      %v1104 = vpop.f32.mrb[0].mxu0
      %v1105 = vadd.f32 %v946, %v1104
      %v1106 = vpop.f32.mrb[0].mxu0
      %1107 = vmatprep.mubr.bf16.mxu0 0
      %1108 = vmatmul.mubr.bf16.gmra.mrb[0].mxu0 %v1008
      %v1109 = vpop.f32.mrb[0].mxu0
      %v1110 = vadd.f32 %v947, %v1109
      %v1111 = vpop.f32.mrb[0].mxu0
      %v1112 = vpop.f32.mrb[0].mxu0
      %v1113 = vadd.f32 %v948, %v1112
      %v1114 = vpop.f32.mrb[0].mxu0
      %1115 = vmatprep.mubr.bf16.mxu0 0
      %1116 = vmatmul.mubr.bf16.gmra.mrb[0].mxu0 %v1011
      %v1117 = vpop.f32.mrb[0].mxu0
      %v1118 = vadd.f32 %v949, %v1117
      %v1119 = vpop.f32.mrb[0].mxu0
      %v1120 = vpop.f32.mrb[0].mxu0
      %v1121 = vadd.f32 %v950, %v1120
      %v1122 = vpop.f32.mrb[0].mxu0
      %1123 = vmatprep.mubr.bf16.mxu0 0
      %1124 = vmatmul.mubr.bf16.gmra.mrb[0].mxu0 %v1014
      %v1125 = vpop.f32.mrb[0].mxu0
      %v1126 = vadd.f32 %v951, %v1125
      %v1127 = vpop.f32.mrb[0].mxu0
      %v1128 = vpop.f32.mrb[0].mxu0
      %v1129 = vadd.f32 %v952, %v1128
      %v1130 = vpop.f32.mrb[0].mxu0
      %1131 = vmatprep.mubr.bf16.mxu0 0
      %1132 = vmatmul.mubr.bf16.gmra.mrb[0].mxu0 %v1017
      %v1133 = vpop.f32.mrb[0].mxu0
      %v1134 = vadd.f32 %v953, %v1133
      %v1135 = vpop.f32.mrb[0].mxu0
      %v1136 = vpop.f32.mrb[0].mxu0
      %v1137 = vadd.f32 %v954, %v1136
      %v1138 = vpop.f32.mrb[0].mxu0
      %1139 = vdwg.mxu0
      %1140 = vmax.xlane.f32.xlu0 %v1078
      %v1141 = vpop.xlane.xlu0 %1140
      %1142 = vmax.xlane.f32.xlu0 %v1081
      %v1143 = vpop.xlane.xlu0 %1142
      %1144 = vmax.xlane.f32.xlu0 %v1086
      %v1145 = vpop.xlane.xlu0 %1144
      %1146 = vmax.xlane.f32.xlu0 %v1089
      %v1147 = vpop.xlane.xlu0 %1146
      %1148 = vmax.xlane.f32.xlu0 %v1094
      %v1149 = vpop.xlane.xlu0 %1148
      %1150 = vmax.xlane.f32.xlu0 %v1097
      %v1151 = vpop.xlane.xlu0 %1150
      %1152 = vmax.xlane.f32.xlu0 %v1102
      %v1153 = vpop.xlane.xlu0 %1152
      %1154 = vmax.xlane.f32.xlu0 %v1105
      %v1155 = vpop.xlane.xlu0 %1154
      %1156 = vmax.xlane.f32.xlu0 %v1110
      %v1157 = vpop.xlane.xlu0 %1156
      %1158 = vmax.xlane.f32.xlu0 %v1113
      %v1159 = vpop.xlane.xlu0 %1158
      %1160 = vmax.xlane.f32.xlu0 %v1118
      %v1161 = vpop.xlane.xlu0 %1160
      %1162 = vmax.xlane.f32.xlu0 %v1121
      %v1163 = vpop.xlane.xlu0 %1162
      %1164 = vmax.xlane.f32.xlu0 %v1126
      %v1165 = vpop.xlane.xlu0 %1164
      %1166 = vmax.xlane.f32.xlu0 %v1129
      %v1167 = vpop.xlane.xlu0 %1166
      %1168 = vmax.xlane.f32.xlu0 %v1134
      %v1169 = vpop.xlane.xlu0 %1168
      %1170 = vmax.xlane.f32.xlu0 %v1137
      %v1171 = vpop.xlane.xlu0 %1170
      %v1172 = vsub.f32 %v1078, %v1141
      %v1173 = vsub.f32 %v1081, %v1143
      %v1174 = vsub.f32 %v1086, %v1145
      %v1175 = vsub.f32 %v1089, %v1147
      %v1176 = vsub.f32 %v1094, %v1149
      %v1177 = vsub.f32 %v1097, %v1151
      %v1178 = vsub.f32 %v1102, %v1153
      %v1179 = vsub.f32 %v1105, %v1155
      %v1180 = vsub.f32 %v1110, %v1157
      %v1181 = vsub.f32 %v1113, %v1159
      %v1182 = vsub.f32 %v1118, %v1161
      %v1183 = vsub.f32 %v1121, %v1163
      %v1184 = vsub.f32 %v1126, %v1165
      %v1185 = vsub.f32 %v1129, %v1167
      %v1186 = vsub.f32 %v1134, %v1169
      %v1187 = vsub.f32 %v1137, %v1171
      %v1188 = vmul.f32 %v1172, 1.442695
      %v1189 = vpow.pop %v1188
      %v1190 = vmul.f32 %v1173, 1.442695
      %v1191 = vpow.pop %v1190
      %v1192 = vmul.f32 %v1174, 1.442695
      %v1193 = vpow.pop %v1192
      %v1194 = vmul.f32 %v1175, 1.442695
      %v1195 = vpow.pop %v1194
      %v1196 = vmul.f32 %v1176, 1.442695
      %v1197 = vpow.pop %v1196
      %v1198 = vmul.f32 %v1177, 1.442695
      %v1199 = vpow.pop %v1198
      %v1200 = vmul.f32 %v1178, 1.442695
      %v1201 = vpow.pop %v1200
      %v1202 = vmul.f32 %v1179, 1.442695
      %v1203 = vpow.pop %v1202
      %v1204 = vmul.f32 %v1180, 1.442695
      %v1205 = vpow.pop %v1204
      %v1206 = vmul.f32 %v1181, 1.442695
      %v1207 = vpow.pop %v1206
      %v1208 = vmul.f32 %v1182, 1.442695
      %v1209 = vpow.pop %v1208
      %v1210 = vmul.f32 %v1183, 1.442695
      %v1211 = vpow.pop %v1210
      %v1212 = vmul.f32 %v1184, 1.442695
      %v1213 = vpow.pop %v1212
      %v1214 = vmul.f32 %v1185, 1.442695
      %v1215 = vpow.pop %v1214
      %v1216 = vmul.f32 %v1186, 1.442695
      %v1217 = vpow.pop %v1216
      %v1218 = vmul.f32 %v1187, 1.442695
      %v1219 = vpow.pop %v1218
      %1220 = vadd.xlane.f32.xlu0 %v1189
      %v1221 = vpop.xlane.xlu0 %1220
      %1222 = vadd.xlane.f32.xlu0 %v1191
      %v1223 = vpop.xlane.xlu0 %1222
      %1224 = vadd.xlane.f32.xlu0 %v1193
      %v1225 = vpop.xlane.xlu0 %1224
      %1226 = vadd.xlane.f32.xlu0 %v1195
      %v1227 = vpop.xlane.xlu0 %1226
      %1228 = vadd.xlane.f32.xlu0 %v1197
      %v1229 = vpop.xlane.xlu0 %1228
      %1230 = vadd.xlane.f32.xlu0 %v1199
      %v1231 = vpop.xlane.xlu0 %1230
      %1232 = vadd.xlane.f32.xlu0 %v1201
      %v1233 = vpop.xlane.xlu0 %1232
      %1234 = vadd.xlane.f32.xlu0 %v1203
      %v1235 = vpop.xlane.xlu0 %1234
      %1236 = vadd.xlane.f32.xlu0 %v1205
      %v1237 = vpop.xlane.xlu0 %1236
      %1238 = vadd.xlane.f32.xlu0 %v1207
      %v1239 = vpop.xlane.xlu0 %1238
      %1240 = vadd.xlane.f32.xlu0 %v1209
      %v1241 = vpop.xlane.xlu0 %1240
      %1242 = vadd.xlane.f32.xlu0 %v1211
      %v1243 = vpop.xlane.xlu0 %1242
      %1244 = vadd.xlane.f32.xlu0 %v1213
      %v1245 = vpop.xlane.xlu0 %1244
      %1246 = vadd.xlane.f32.xlu0 %v1215
      %v1247 = vpop.xlane.xlu0 %1246
      %1248 = vadd.xlane.f32.xlu0 %v1217
      %v1249 = vpop.xlane.xlu0 %1248
      %1250 = vadd.xlane.f32.xlu0 %v1219
      %v1251 = vpop.xlane.xlu0 %1250
      %v1252 = vrcp.pop %v1221
      %v1253 = vrcp.pop %v1223
      %v1254 = vrcp.pop %v1225
      %v1255 = vrcp.pop %v1227
      %v1256 = vrcp.pop %v1229
      %v1257 = vrcp.pop %v1231
      %v1258 = vrcp.pop %v1233
      %v1259 = vrcp.pop %v1235
      %v1260 = vrcp.pop %v1237
      %v1261 = vrcp.pop %v1239
      %v1262 = vrcp.pop %v1241
      %v1263 = vrcp.pop %v1243
      %v1264 = vrcp.pop %v1245
      %v1265 = vrcp.pop %v1247
      %v1266 = vrcp.pop %v1249
      %v1267 = vrcp.pop %v1251
      %v1268 = vpack.c.bf16 %v1191, %v1189
      %v1269 = vpack.c.bf16 %v1195, %v1193
      %v1270 = vpack.c.bf16 %v1199, %v1197
      %v1271 = vpack.c.bf16 %v1203, %v1201
      %v1272 = vpack.c.bf16 %v1207, %v1205
      %v1273 = vpack.c.bf16 %v1211, %v1209
      %v1274 = vpack.c.bf16 %v1215, %v1213
      %v1275 = vpack.c.bf16 %v1219, %v1217
      %1276 = vrot.lane.b32.xlu0 %v439, 56
      %v1277 = vpop.permute.xlu0 %1276
      %1278 = vrot.lane.b32.xlu0 %v440, 56
      %v1279 = vpop.permute.xlu0 %1278
      %1280 = vrot.lane.b32.xlu0 %v441, 56
      %v1281 = vpop.permute.xlu0 %1280
      %1282 = vrot.lane.b32.xlu0 %v442, 56
      %v1283 = vpop.permute.xlu0 %1282
      %1284 = vrot.lane.b32.xlu0 %v443, 56
      %v1285 = vpop.permute.xlu0 %1284
      %1286 = vrot.lane.b32.xlu0 %v444, 56
      %v1287 = vpop.permute.xlu0 %1286
      %1288 = vrot.lane.b32.xlu0 %v445, 56
      %v1289 = vpop.permute.xlu0 %1288
      %1290 = vrot.lane.b32.xlu0 %v446, 56
      %v1291 = vpop.permute.xlu0 %1290
      %1300 = vmatprep.subr.bf16.mxu0 0
      %1301 = vmatpush1.bf16.msra.mxu0 %v1277
      %1302 = vmatprep.subr.bf16.mxu0 0
      %1303 = vmatpush1.bf16.msra.mxu0 %v1279
      %1304 = vmatprep.subr.bf16.mxu0 0
      %1305 = vmatpush1.bf16.msra.mxu0 %v1281
      %1306 = vmatprep.subr.bf16.mxu0 0
      %1307 = vmatpush1.bf16.msra.mxu0 %v1283
      %1308 = vmatprep.subr.bf16.mxu0 0
      %1309 = vmatpush1.bf16.msra.mxu0 %v1285
      %1310 = vmatprep.subr.bf16.mxu0 0
      %1311 = vmatpush1.bf16.msra.mxu0 %v1287
      %1312 = vmatprep.subr.bf16.mxu0 0
      %1313 = vmatpush1.bf16.msra.mxu0 %v1289
      %1314 = vmatprep.subr.bf16.mxu0 0
      %1315 = vmatpush1.bf16.msra.mxu0 %v1291
      %1316 = vmatprep.subr.bf16.mxu0 0
      %1317 = vmatpush1.bf16.msra.mxu0 0
      %1318 = vmatprep.subr.bf16.mxu0 0
      %1319 = vmatpush1.bf16.msra.mxu0 0
      %1320 = vmatprep.subr.bf16.mxu0 0
      %1321 = vmatpush1.bf16.msra.mxu0 0
      %1322 = vmatprep.subr.bf16.mxu0 0
      %1323 = vmatpush1.bf16.msra.mxu0 0
      %1324 = vmatprep.subr.bf16.mxu0 0
      %1325 = vmatpush1.bf16.msra.mxu0 0
      %1326 = vmatprep.subr.bf16.mxu0 0
      %1327 = vmatpush1.bf16.msra.mxu0 0
      %1328 = vmatprep.subr.bf16.mxu0 0
      %1329 = vmatpush1.bf16.msra.mxu0 0
      %1330 = vmatprep.subr.bf16.mxu0 0
      %1331 = vmatpush1.bf16.msra.mxu0 0
      %1332 = vmatprep.mubr.bf16.mxu0 0
      %1333 = vmatmul.mubr.bf16.gmra.mrb[0].mxu0 %v1268
      %v1334 = vpop.f32.mrb[0].mxu0
      %v1335 = vadd.f32 0.0, %v1334
      %v1336 = vpop.f32.mrb[0].mxu0
      %v1337 = vpop.f32.mrb[0].mxu0
      %v1338 = vadd.f32 0.0, %v1337
      %v1339 = vpop.f32.mrb[0].mxu0
      %1340 = vmatprep.mubr.bf16.mxu0 0
      %1341 = vmatmul.mubr.bf16.gmra.mrb[0].mxu0 %v1269
      %v1342 = vpop.f32.mrb[0].mxu0
      %v1343 = vadd.f32 0.0, %v1342
      %v1344 = vpop.f32.mrb[0].mxu0
      %v1345 = vpop.f32.mrb[0].mxu0
      %v1346 = vadd.f32 0.0, %v1345
      %v1347 = vpop.f32.mrb[0].mxu0
      %1348 = vmatprep.mubr.bf16.mxu0 0
      %1349 = vmatmul.mubr.bf16.gmra.mrb[0].mxu0 %v1270
      %v1350 = vpop.f32.mrb[0].mxu0
      %v1351 = vadd.f32 0.0, %v1350
      %v1352 = vpop.f32.mrb[0].mxu0
      %v1353 = vpop.f32.mrb[0].mxu0
      %v1354 = vadd.f32 0.0, %v1353
      %v1355 = vpop.f32.mrb[0].mxu0
      %1356 = vmatprep.mubr.bf16.mxu0 0
      %1357 = vmatmul.mubr.bf16.gmra.mrb[0].mxu0 %v1271
      %v1358 = vpop.f32.mrb[0].mxu0
      %v1359 = vadd.f32 0.0, %v1358
      %v1360 = vpop.f32.mrb[0].mxu0
      %v1361 = vpop.f32.mrb[0].mxu0
      %v1362 = vadd.f32 0.0, %v1361
      %v1363 = vpop.f32.mrb[0].mxu0
      %1364 = vmatprep.mubr.bf16.mxu0 0
      %1365 = vmatmul.mubr.bf16.gmra.mrb[0].mxu0 %v1272
      %v1366 = vpop.f32.mrb[0].mxu0
      %v1367 = vadd.f32 0.0, %v1366
      %v1368 = vpop.f32.mrb[0].mxu0
      %v1369 = vpop.f32.mrb[0].mxu0
      %v1370 = vadd.f32 0.0, %v1369
      %v1371 = vpop.f32.mrb[0].mxu0
      %1372 = vmatprep.mubr.bf16.mxu0 0
      %1373 = vmatmul.mubr.bf16.gmra.mrb[0].mxu0 %v1273
      %v1374 = vpop.f32.mrb[0].mxu0
      %v1375 = vadd.f32 0.0, %v1374
      %v1376 = vpop.f32.mrb[0].mxu0
      %v1377 = vpop.f32.mrb[0].mxu0
      %v1378 = vadd.f32 0.0, %v1377
      %v1379 = vpop.f32.mrb[0].mxu0
      %1380 = vmatprep.mubr.bf16.mxu0 0
      %1381 = vmatmul.mubr.bf16.gmra.mrb[0].mxu0 %v1274
      %v1382 = vpop.f32.mrb[0].mxu0
      %v1383 = vadd.f32 0.0, %v1382
      %v1384 = vpop.f32.mrb[0].mxu0
      %v1385 = vpop.f32.mrb[0].mxu0
      %v1386 = vadd.f32 0.0, %v1385
      %v1387 = vpop.f32.mrb[0].mxu0
      %1388 = vmatprep.mubr.bf16.mxu0 0
      %1389 = vmatmul.mubr.bf16.gmra.mrb[0].mxu0 %v1275
      %v1390 = vpop.f32.mrb[0].mxu0
      %v1391 = vadd.f32 0.0, %v1390
      %v1392 = vpop.f32.mrb[0].mxu0
      %v1393 = vpop.f32.mrb[0].mxu0
      %v1394 = vadd.f32 0.0, %v1393
      %v1395 = vpop.f32.mrb[0].mxu0
      %1396 = vdwg.mxu0
      %v1397 = vmul.f32 %v1335, %v1252
      %v1398 = vmul.f32 %v1338, %v1253
      %v1399 = vmul.f32 %v1343, %v1254
      %v1400 = vmul.f32 %v1346, %v1255
      %v1401 = vmul.f32 %v1351, %v1256
      %v1402 = vmul.f32 %v1354, %v1257
      %v1403 = vmul.f32 %v1359, %v1258
      %v1404 = vmul.f32 %v1362, %v1259
      %v1405 = vmul.f32 %v1367, %v1260
      %v1406 = vmul.f32 %v1370, %v1261
      %v1407 = vmul.f32 %v1375, %v1262
      %v1408 = vmul.f32 %v1378, %v1263
      %v1409 = vmul.f32 %v1383, %v1264
      %v1410 = vmul.f32 %v1386, %v1265
      %v1411 = vmul.f32 %v1391, %v1266
      %v1412 = vmul.f32 %v1394, %v1267
      %s1413 = scalar_lea.vmem %s5, 128
      %v1414 = vld [vmem:[%s1413] sm:$0xf]
      %v1415 = vld [vmem:[%s1413 + $0x4] sm:$0xf]
      %v1416 = vld [vmem:[%s1413 + $0x8] sm:$0xf]
      %v1417 = vld [vmem:[%s1413 + $0xc] sm:$0xf]
      %v1418 = vld [vmem:[%s1413 + $0x10] sm:$0xf]
      %v1419 = vld [vmem:[%s1413 + $0x14] sm:$0xf]
      %v1420 = vld [vmem:[%s1413 + $0x18] sm:$0xf]
      %v1421 = vld [vmem:[%s1413 + $0x1c] sm:$0xf]
      %v1422 = vld [vmem:[%s1413 + $0x20] sm:$0xf]
      %v1423 = vld [vmem:[%s1413 + $0x24] sm:$0xf]
      %v1424 = vld [vmem:[%s1413 + $0x28] sm:$0xf]
      %v1425 = vld [vmem:[%s1413 + $0x2c] sm:$0xf]
      %v1426 = vld [vmem:[%s1413 + $0x30] sm:$0xf]
      %v1427 = vld [vmem:[%s1413 + $0x34] sm:$0xf]
      %v1428 = vld [vmem:[%s1413 + $0x38] sm:$0xf]
      %v1429 = vld [vmem:[%s1413 + $0x3c] sm:$0xf]
      %v1430 = vunpack.c.l.bf16 %v1414
      %v1431 = vunpack.c.l.bf16 %v1415
      %v1432 = vunpack.c.l.bf16 %v1416
      %v1433 = vunpack.c.l.bf16 %v1417
      %v1434 = vunpack.c.l.bf16 %v1418
      %v1435 = vunpack.c.l.bf16 %v1419
      %v1436 = vunpack.c.l.bf16 %v1420
      %v1437 = vunpack.c.l.bf16 %v1421
      %v1438 = vunpack.c.l.bf16 %v1422
      %v1439 = vunpack.c.l.bf16 %v1423
      %v1440 = vunpack.c.l.bf16 %v1424
      %v1441 = vunpack.c.l.bf16 %v1425
      %v1442 = vunpack.c.l.bf16 %v1426
      %v1443 = vunpack.c.l.bf16 %v1427
      %v1444 = vunpack.c.l.bf16 %v1428
      %v1445 = vunpack.c.l.bf16 %v1429
      %1446 = vrot.lane.b32.xlu0 %v431, 112
      %v1447 = vpop.permute.xlu0 %1446
      %1448 = vrot.lane.b32.xlu0 %v432, 112
      %v1449 = vpop.permute.xlu0 %1448
      %1450 = vrot.lane.b32.xlu0 %v433, 112
      %v1451 = vpop.permute.xlu0 %1450
      %1452 = vrot.lane.b32.xlu0 %v434, 112
      %v1453 = vpop.permute.xlu0 %1452
      %1454 = vrot.lane.b32.xlu0 %v435, 112
      %v1455 = vpop.permute.xlu0 %1454
      %1456 = vrot.lane.b32.xlu0 %v436, 112
      %v1457 = vpop.permute.xlu0 %1456
      %1458 = vrot.lane.b32.xlu0 %v437, 112
      %v1459 = vpop.permute.xlu0 %1458
      %1460 = vrot.lane.b32.xlu0 %v438, 112
      %v1461 = vpop.permute.xlu0 %1460
      %1462 = vrot.lane.b32.xlu0 %v439, 80
      %v1463 = vpop.permute.xlu0 %1462
      %1464 = vrot.lane.b32.xlu0 %v440, 80
      %v1465 = vpop.permute.xlu0 %1464
      %1466 = vrot.lane.b32.xlu0 %v441, 80
      %v1467 = vpop.permute.xlu0 %1466
      %1468 = vrot.lane.b32.xlu0 %v442, 80
      %v1469 = vpop.permute.xlu0 %1468
      %1470 = vrot.lane.b32.xlu0 %v443, 80
      %v1471 = vpop.permute.xlu0 %1470
      %1472 = vrot.lane.b32.xlu0 %v444, 80
      %v1473 = vpop.permute.xlu0 %1472
      %1474 = vrot.lane.b32.xlu0 %v445, 80
      %v1475 = vpop.permute.xlu0 %1474
      %1476 = vrot.lane.b32.xlu0 %v446, 80
      %v1477 = vpop.permute.xlu0 %1476
      %v1479 = vsel %vm503, %v1447, 0
      %v1482 = vsel %vm503, %v1449, 0
      %v1485 = vsel %vm503, %v1451, 0
      %v1488 = vsel %vm503, %v1453, 0
      %v1491 = vsel %vm503, %v1455, 0
      %v1494 = vsel %vm503, %v1457, 0
      %v1497 = vsel %vm503, %v1459, 0
      %v1500 = vsel %vm503, %v1461, 0
      %v1503 = vsel %vm503, %v1463, 0
      %v1506 = vsel %vm503, %v1465, 0
      %v1509 = vsel %vm503, %v1467, 0
      %v1512 = vsel %vm503, %v1469, 0
      %v1515 = vsel %vm503, %v1471, 0
      %v1518 = vsel %vm503, %v1473, 0
      %v1521 = vsel %vm503, %v1475, 0
      %v1524 = vsel %vm503, %v1477, 0
      %1526 = vmatprep.subr.bf16.mxu0 0
      %1527 = vmatpush1.bf16.xpose.msra.mxu0 %v1503
      %1528 = vmatprep.subr.bf16.mxu0 0
      %1529 = vmatpush1.bf16.xpose.msra.mxu0 %v1506
      %1530 = vmatprep.subr.bf16.mxu0 0
      %1531 = vmatpush1.bf16.xpose.msra.mxu0 %v1509
      %1532 = vmatprep.subr.bf16.mxu0 0
      %1533 = vmatpush1.bf16.xpose.msra.mxu0 %v1512
      %1534 = vmatprep.subr.bf16.mxu0 0
      %1535 = vmatpush1.bf16.xpose.msra.mxu0 %v1515
      %1536 = vmatprep.subr.bf16.mxu0 0
      %1537 = vmatpush1.bf16.xpose.msra.mxu0 %v1518
      %1538 = vmatprep.subr.bf16.mxu0 0
      %1539 = vmatpush1.bf16.xpose.msra.mxu0 %v1521
      %1540 = vmatprep.subr.bf16.mxu0 0
      %1541 = vmatpush1.bf16.xpose.msra.mxu0 %v1524
      %1542 = vmatprep.subr.bf16.mxu0 0
      %1543 = vmatpush1.bf16.xpose.msra.mxu0 0
      %1544 = vmatprep.subr.bf16.mxu0 0
      %1545 = vmatpush1.bf16.xpose.msra.mxu0 0
      %1546 = vmatprep.subr.bf16.mxu0 0
      %1547 = vmatpush1.bf16.xpose.msra.mxu0 0
      %1548 = vmatprep.subr.bf16.mxu0 0
      %1549 = vmatpush1.bf16.xpose.msra.mxu0 0
      %1550 = vmatprep.subr.bf16.mxu0 0
      %1551 = vmatpush1.bf16.xpose.msra.mxu0 0
      %1552 = vmatprep.subr.bf16.mxu0 0
      %1553 = vmatpush1.bf16.xpose.msra.mxu0 0
      %1554 = vmatprep.subr.bf16.mxu0 0
      %1555 = vmatpush1.bf16.xpose.msra.mxu0 0
      %1556 = vmatprep.subr.bf16.mxu0 0
      %1557 = vmatpush1.bf16.xpose.msra.mxu0 0
      %1558 = vmatprep.mubr.bf16.mxu0 0
      %1559 = vmatmul.mubr.bf16.gmra.mrb[0].mxu0 %v1479
      %v1560 = vpop.f32.mrb[0].mxu0
      %v1561 = vadd.f32 %v1430, %v1560
      %v1562 = vpop.f32.mrb[0].mxu0
      %v1563 = vpop.f32.mrb[0].mxu0
      %v1564 = vadd.f32 %v1431, %v1563
      %v1565 = vpop.f32.mrb[0].mxu0
      %1566 = vmatprep.mubr.bf16.mxu0 0
      %1567 = vmatmul.mubr.bf16.gmra.mrb[0].mxu0 %v1482
      %v1568 = vpop.f32.mrb[0].mxu0
      %v1569 = vadd.f32 %v1432, %v1568
      %v1570 = vpop.f32.mrb[0].mxu0
      %v1571 = vpop.f32.mrb[0].mxu0
      %v1572 = vadd.f32 %v1433, %v1571
      %v1573 = vpop.f32.mrb[0].mxu0
      %1574 = vmatprep.mubr.bf16.mxu0 0
      %1575 = vmatmul.mubr.bf16.gmra.mrb[0].mxu0 %v1485
      %v1576 = vpop.f32.mrb[0].mxu0
      %v1577 = vadd.f32 %v1434, %v1576
      %v1578 = vpop.f32.mrb[0].mxu0
      %v1579 = vpop.f32.mrb[0].mxu0
      %v1580 = vadd.f32 %v1435, %v1579
      %v1581 = vpop.f32.mrb[0].mxu0
      %1582 = vmatprep.mubr.bf16.mxu0 0
      %1583 = vmatmul.mubr.bf16.gmra.mrb[0].mxu0 %v1488
      %v1584 = vpop.f32.mrb[0].mxu0
      %v1585 = vadd.f32 %v1436, %v1584
      %v1586 = vpop.f32.mrb[0].mxu0
      %v1587 = vpop.f32.mrb[0].mxu0
      %v1588 = vadd.f32 %v1437, %v1587
      %v1589 = vpop.f32.mrb[0].mxu0
      %1590 = vmatprep.mubr.bf16.mxu0 0
      %1591 = vmatmul.mubr.bf16.gmra.mrb[0].mxu0 %v1491
      %v1592 = vpop.f32.mrb[0].mxu0
      %v1593 = vadd.f32 %v1438, %v1592
      %v1594 = vpop.f32.mrb[0].mxu0
      %v1595 = vpop.f32.mrb[0].mxu0
      %v1596 = vadd.f32 %v1439, %v1595
      %v1597 = vpop.f32.mrb[0].mxu0
      %1598 = vmatprep.mubr.bf16.mxu0 0
      %1599 = vmatmul.mubr.bf16.gmra.mrb[0].mxu0 %v1494
      %v1600 = vpop.f32.mrb[0].mxu0
      %v1601 = vadd.f32 %v1440, %v1600
      %v1602 = vpop.f32.mrb[0].mxu0
      %v1603 = vpop.f32.mrb[0].mxu0
      %v1604 = vadd.f32 %v1441, %v1603
      %v1605 = vpop.f32.mrb[0].mxu0
      %1606 = vmatprep.mubr.bf16.mxu0 0
      %1607 = vmatmul.mubr.bf16.gmra.mrb[0].mxu0 %v1497
      %v1608 = vpop.f32.mrb[0].mxu0
      %v1609 = vadd.f32 %v1442, %v1608
      %v1610 = vpop.f32.mrb[0].mxu0
      %v1611 = vpop.f32.mrb[0].mxu0
      %v1612 = vadd.f32 %v1443, %v1611
      %v1613 = vpop.f32.mrb[0].mxu0
      %1614 = vmatprep.mubr.bf16.mxu0 0
      %1615 = vmatmul.mubr.bf16.gmra.mrb[0].mxu0 %v1500
      %v1616 = vpop.f32.mrb[0].mxu0
      %v1617 = vadd.f32 %v1444, %v1616
      %v1618 = vpop.f32.mrb[0].mxu0
      %v1619 = vpop.f32.mrb[0].mxu0
      %v1620 = vadd.f32 %v1445, %v1619
      %v1621 = vpop.f32.mrb[0].mxu0
      %1622 = vdwg.mxu0
      %1623 = vmax.xlane.f32.xlu0 %v1561
      %v1624 = vpop.xlane.xlu0 %1623
      %1625 = vmax.xlane.f32.xlu0 %v1564
      %v1626 = vpop.xlane.xlu0 %1625
      %1627 = vmax.xlane.f32.xlu0 %v1569
      %v1628 = vpop.xlane.xlu0 %1627
      %1629 = vmax.xlane.f32.xlu0 %v1572
      %v1630 = vpop.xlane.xlu0 %1629
      %1631 = vmax.xlane.f32.xlu0 %v1577
      %v1632 = vpop.xlane.xlu0 %1631
      %1633 = vmax.xlane.f32.xlu0 %v1580
      %v1634 = vpop.xlane.xlu0 %1633
      %1635 = vmax.xlane.f32.xlu0 %v1585
      %v1636 = vpop.xlane.xlu0 %1635
      %1637 = vmax.xlane.f32.xlu0 %v1588
      %v1638 = vpop.xlane.xlu0 %1637
      %1639 = vmax.xlane.f32.xlu0 %v1593
      %v1640 = vpop.xlane.xlu0 %1639
      %1641 = vmax.xlane.f32.xlu0 %v1596
      %v1642 = vpop.xlane.xlu0 %1641
      %1643 = vmax.xlane.f32.xlu0 %v1601
      %v1644 = vpop.xlane.xlu0 %1643
      %1645 = vmax.xlane.f32.xlu0 %v1604
      %v1646 = vpop.xlane.xlu0 %1645
      %1647 = vmax.xlane.f32.xlu0 %v1609
      %v1648 = vpop.xlane.xlu0 %1647
      %1649 = vmax.xlane.f32.xlu0 %v1612
      %v1650 = vpop.xlane.xlu0 %1649
      %1651 = vmax.xlane.f32.xlu0 %v1617
      %v1652 = vpop.xlane.xlu0 %1651
      %1653 = vmax.xlane.f32.xlu0 %v1620
      %v1654 = vpop.xlane.xlu0 %1653
      %v1655 = vsub.f32 %v1561, %v1624
      %v1656 = vsub.f32 %v1564, %v1626
      %v1657 = vsub.f32 %v1569, %v1628
      %v1658 = vsub.f32 %v1572, %v1630
      %v1659 = vsub.f32 %v1577, %v1632
      %v1660 = vsub.f32 %v1580, %v1634
      %v1661 = vsub.f32 %v1585, %v1636
      %v1662 = vsub.f32 %v1588, %v1638
      %v1663 = vsub.f32 %v1593, %v1640
      %v1664 = vsub.f32 %v1596, %v1642
      %v1665 = vsub.f32 %v1601, %v1644
      %v1666 = vsub.f32 %v1604, %v1646
      %v1667 = vsub.f32 %v1609, %v1648
      %v1668 = vsub.f32 %v1612, %v1650
      %v1669 = vsub.f32 %v1617, %v1652
      %v1670 = vsub.f32 %v1620, %v1654
      %v1671 = vmul.f32 %v1655, 1.442695
      %v1672 = vpow.pop %v1671
      %v1673 = vmul.f32 %v1656, 1.442695
      %v1674 = vpow.pop %v1673
      %v1675 = vmul.f32 %v1657, 1.442695
      %v1676 = vpow.pop %v1675
      %v1677 = vmul.f32 %v1658, 1.442695
      %v1678 = vpow.pop %v1677
      %v1679 = vmul.f32 %v1659, 1.442695
      %v1680 = vpow.pop %v1679
      %v1681 = vmul.f32 %v1660, 1.442695
      %v1682 = vpow.pop %v1681
      %v1683 = vmul.f32 %v1661, 1.442695
      %v1684 = vpow.pop %v1683
      %v1685 = vmul.f32 %v1662, 1.442695
      %v1686 = vpow.pop %v1685
      %v1687 = vmul.f32 %v1663, 1.442695
      %v1688 = vpow.pop %v1687
      %v1689 = vmul.f32 %v1664, 1.442695
      %v1690 = vpow.pop %v1689
      %v1691 = vmul.f32 %v1665, 1.442695
      %v1692 = vpow.pop %v1691
      %v1693 = vmul.f32 %v1666, 1.442695
      %v1694 = vpow.pop %v1693
      %v1695 = vmul.f32 %v1667, 1.442695
      %v1696 = vpow.pop %v1695
      %v1697 = vmul.f32 %v1668, 1.442695
      %v1698 = vpow.pop %v1697
      %v1699 = vmul.f32 %v1669, 1.442695
      %v1700 = vpow.pop %v1699
      %v1701 = vmul.f32 %v1670, 1.442695
      %v1702 = vpow.pop %v1701
      %1703 = vadd.xlane.f32.xlu0 %v1672
      %v1704 = vpop.xlane.xlu0 %1703
      %1705 = vadd.xlane.f32.xlu0 %v1674
      %v1706 = vpop.xlane.xlu0 %1705
      %1707 = vadd.xlane.f32.xlu0 %v1676
      %v1708 = vpop.xlane.xlu0 %1707
      %1709 = vadd.xlane.f32.xlu0 %v1678
      %v1710 = vpop.xlane.xlu0 %1709
      %1711 = vadd.xlane.f32.xlu0 %v1680
      %v1712 = vpop.xlane.xlu0 %1711
      %1713 = vadd.xlane.f32.xlu0 %v1682
      %v1714 = vpop.xlane.xlu0 %1713
      %1715 = vadd.xlane.f32.xlu0 %v1684
      %v1716 = vpop.xlane.xlu0 %1715
      %1717 = vadd.xlane.f32.xlu0 %v1686
      %v1718 = vpop.xlane.xlu0 %1717
      %1719 = vadd.xlane.f32.xlu0 %v1688
      %v1720 = vpop.xlane.xlu0 %1719
      %1721 = vadd.xlane.f32.xlu0 %v1690
      %v1722 = vpop.xlane.xlu0 %1721
      %1723 = vadd.xlane.f32.xlu0 %v1692
      %v1724 = vpop.xlane.xlu0 %1723
      %1725 = vadd.xlane.f32.xlu0 %v1694
      %v1726 = vpop.xlane.xlu0 %1725
      %1727 = vadd.xlane.f32.xlu0 %v1696
      %v1728 = vpop.xlane.xlu0 %1727
      %1729 = vadd.xlane.f32.xlu0 %v1698
      %v1730 = vpop.xlane.xlu0 %1729
      %1731 = vadd.xlane.f32.xlu0 %v1700
      %v1732 = vpop.xlane.xlu0 %1731
      %1733 = vadd.xlane.f32.xlu0 %v1702
      %v1734 = vpop.xlane.xlu0 %1733
      %v1735 = vrcp.pop %v1704
      %v1736 = vrcp.pop %v1706
      %v1737 = vrcp.pop %v1708
      %v1738 = vrcp.pop %v1710
      %v1739 = vrcp.pop %v1712
      %v1740 = vrcp.pop %v1714
      %v1741 = vrcp.pop %v1716
      %v1742 = vrcp.pop %v1718
      %v1743 = vrcp.pop %v1720
      %v1744 = vrcp.pop %v1722
      %v1745 = vrcp.pop %v1724
      %v1746 = vrcp.pop %v1726
      %v1747 = vrcp.pop %v1728
      %v1748 = vrcp.pop %v1730
      %v1749 = vrcp.pop %v1732
      %v1750 = vrcp.pop %v1734
      %v1751 = vpack.c.bf16 %v1674, %v1672
      %v1752 = vpack.c.bf16 %v1678, %v1676
      %v1753 = vpack.c.bf16 %v1682, %v1680
      %v1754 = vpack.c.bf16 %v1686, %v1684
      %v1755 = vpack.c.bf16 %v1690, %v1688
      %v1756 = vpack.c.bf16 %v1694, %v1692
      %v1757 = vpack.c.bf16 %v1698, %v1696
      %v1758 = vpack.c.bf16 %v1702, %v1700
      %1759 = vrot.lane.b32.xlu0 %v439, 48
      %v1760 = vpop.permute.xlu0 %1759
      %1761 = vrot.lane.b32.xlu0 %v440, 48
      %v1762 = vpop.permute.xlu0 %1761
      %1763 = vrot.lane.b32.xlu0 %v441, 48
      %v1764 = vpop.permute.xlu0 %1763
      %1765 = vrot.lane.b32.xlu0 %v442, 48
      %v1766 = vpop.permute.xlu0 %1765
      %1767 = vrot.lane.b32.xlu0 %v443, 48
      %v1768 = vpop.permute.xlu0 %1767
      %1769 = vrot.lane.b32.xlu0 %v444, 48
      %v1770 = vpop.permute.xlu0 %1769
      %1771 = vrot.lane.b32.xlu0 %v445, 48
      %v1772 = vpop.permute.xlu0 %1771
      %1773 = vrot.lane.b32.xlu0 %v446, 48
      %v1774 = vpop.permute.xlu0 %1773
      %1783 = vmatprep.subr.bf16.mxu0 0
      %1784 = vmatpush1.bf16.msra.mxu0 %v1760
      %1785 = vmatprep.subr.bf16.mxu0 0
      %1786 = vmatpush1.bf16.msra.mxu0 %v1762
      %1787 = vmatprep.subr.bf16.mxu0 0
      %1788 = vmatpush1.bf16.msra.mxu0 %v1764
      %1789 = vmatprep.subr.bf16.mxu0 0
      %1790 = vmatpush1.bf16.msra.mxu0 %v1766
      %1791 = vmatprep.subr.bf16.mxu0 0
      %1792 = vmatpush1.bf16.msra.mxu0 %v1768
      %1793 = vmatprep.subr.bf16.mxu0 0
      %1794 = vmatpush1.bf16.msra.mxu0 %v1770
      %1795 = vmatprep.subr.bf16.mxu0 0
      %1796 = vmatpush1.bf16.msra.mxu0 %v1772
      %1797 = vmatprep.subr.bf16.mxu0 0
      %1798 = vmatpush1.bf16.msra.mxu0 %v1774
      %1799 = vmatprep.subr.bf16.mxu0 0
      %1800 = vmatpush1.bf16.msra.mxu0 0
      %1801 = vmatprep.subr.bf16.mxu0 0
      %1802 = vmatpush1.bf16.msra.mxu0 0
      %1803 = vmatprep.subr.bf16.mxu0 0
      %1804 = vmatpush1.bf16.msra.mxu0 0
      %1805 = vmatprep.subr.bf16.mxu0 0
      %1806 = vmatpush1.bf16.msra.mxu0 0
      %1807 = vmatprep.subr.bf16.mxu0 0
      %1808 = vmatpush1.bf16.msra.mxu0 0
      %1809 = vmatprep.subr.bf16.mxu0 0
      %1810 = vmatpush1.bf16.msra.mxu0 0
      %1811 = vmatprep.subr.bf16.mxu0 0
      %1812 = vmatpush1.bf16.msra.mxu0 0
      %1813 = vmatprep.subr.bf16.mxu0 0
      %1814 = vmatpush1.bf16.msra.mxu0 0
      %1815 = vmatprep.mubr.bf16.mxu0 0
      %1816 = vmatmul.mubr.bf16.gmra.mrb[0].mxu0 %v1751
      %v1817 = vpop.f32.mrb[0].mxu0
      %v1818 = vadd.f32 0.0, %v1817
      %v1819 = vpop.f32.mrb[0].mxu0
      %v1820 = vpop.f32.mrb[0].mxu0
      %v1821 = vadd.f32 0.0, %v1820
      %v1822 = vpop.f32.mrb[0].mxu0
      %1823 = vmatprep.mubr.bf16.mxu0 0
      %1824 = vmatmul.mubr.bf16.gmra.mrb[0].mxu0 %v1752
      %v1825 = vpop.f32.mrb[0].mxu0
      %v1826 = vadd.f32 0.0, %v1825
      %v1827 = vpop.f32.mrb[0].mxu0
      %v1828 = vpop.f32.mrb[0].mxu0
      %v1829 = vadd.f32 0.0, %v1828
      %v1830 = vpop.f32.mrb[0].mxu0
      %1831 = vmatprep.mubr.bf16.mxu0 0
      %1832 = vmatmul.mubr.bf16.gmra.mrb[0].mxu0 %v1753
      %v1833 = vpop.f32.mrb[0].mxu0
      %v1834 = vadd.f32 0.0, %v1833
      %v1835 = vpop.f32.mrb[0].mxu0
      %v1836 = vpop.f32.mrb[0].mxu0
      %v1837 = vadd.f32 0.0, %v1836
      %v1838 = vpop.f32.mrb[0].mxu0
      %1839 = vmatprep.mubr.bf16.mxu0 0
      %1840 = vmatmul.mubr.bf16.gmra.mrb[0].mxu0 %v1754
      %v1841 = vpop.f32.mrb[0].mxu0
      %v1842 = vadd.f32 0.0, %v1841
      %v1843 = vpop.f32.mrb[0].mxu0
      %v1844 = vpop.f32.mrb[0].mxu0
      %v1845 = vadd.f32 0.0, %v1844
      %v1846 = vpop.f32.mrb[0].mxu0
      %1847 = vmatprep.mubr.bf16.mxu0 0
      %1848 = vmatmul.mubr.bf16.gmra.mrb[0].mxu0 %v1755
      %v1849 = vpop.f32.mrb[0].mxu0
      %v1850 = vadd.f32 0.0, %v1849
      %v1851 = vpop.f32.mrb[0].mxu0
      %v1852 = vpop.f32.mrb[0].mxu0
      %v1853 = vadd.f32 0.0, %v1852
      %v1854 = vpop.f32.mrb[0].mxu0
      %1855 = vmatprep.mubr.bf16.mxu0 0
      %1856 = vmatmul.mubr.bf16.gmra.mrb[0].mxu0 %v1756
      %v1857 = vpop.f32.mrb[0].mxu0
      %v1858 = vadd.f32 0.0, %v1857
      %v1859 = vpop.f32.mrb[0].mxu0
      %v1860 = vpop.f32.mrb[0].mxu0
      %v1861 = vadd.f32 0.0, %v1860
      %v1862 = vpop.f32.mrb[0].mxu0
      %1863 = vmatprep.mubr.bf16.mxu0 0
      %1864 = vmatmul.mubr.bf16.gmra.mrb[0].mxu0 %v1757
      %v1865 = vpop.f32.mrb[0].mxu0
      %v1866 = vadd.f32 0.0, %v1865
      %v1867 = vpop.f32.mrb[0].mxu0
      %v1868 = vpop.f32.mrb[0].mxu0
      %v1869 = vadd.f32 0.0, %v1868
      %v1870 = vpop.f32.mrb[0].mxu0
      %1871 = vmatprep.mubr.bf16.mxu0 0
      %1872 = vmatmul.mubr.bf16.gmra.mrb[0].mxu0 %v1758
      %v1873 = vpop.f32.mrb[0].mxu0
      %v1874 = vadd.f32 0.0, %v1873
      %v1875 = vpop.f32.mrb[0].mxu0
      %v1876 = vpop.f32.mrb[0].mxu0
      %v1877 = vadd.f32 0.0, %v1876
      %v1878 = vpop.f32.mrb[0].mxu0
      %1879 = vdwg.mxu0
      %v1880 = vmul.f32 %v1818, %v1735
      %v1881 = vmul.f32 %v1821, %v1736
      %v1882 = vmul.f32 %v1826, %v1737
      %v1883 = vmul.f32 %v1829, %v1738
      %v1884 = vmul.f32 %v1834, %v1739
      %v1885 = vmul.f32 %v1837, %v1740
      %v1886 = vmul.f32 %v1842, %v1741
      %v1887 = vmul.f32 %v1845, %v1742
      %v1888 = vmul.f32 %v1850, %v1743
      %v1889 = vmul.f32 %v1853, %v1744
      %v1890 = vmul.f32 %v1858, %v1745
      %v1891 = vmul.f32 %v1861, %v1746
      %v1892 = vmul.f32 %v1866, %v1747
      %v1893 = vmul.f32 %v1869, %v1748
      %v1894 = vmul.f32 %v1874, %v1749
      %v1895 = vmul.f32 %v1877, %v1750
      %s1896 = scalar_lea.vmem %s5, 192
      %v1897 = vld [vmem:[%s1896] sm:$0xf]
      %v1898 = vld [vmem:[%s1896 + $0x4] sm:$0xf]
      %v1899 = vld [vmem:[%s1896 + $0x8] sm:$0xf]
      %v1900 = vld [vmem:[%s1896 + $0xc] sm:$0xf]
      %v1901 = vld [vmem:[%s1896 + $0x10] sm:$0xf]
      %v1902 = vld [vmem:[%s1896 + $0x14] sm:$0xf]
      %v1903 = vld [vmem:[%s1896 + $0x18] sm:$0xf]
      %v1904 = vld [vmem:[%s1896 + $0x1c] sm:$0xf]
      %v1905 = vld [vmem:[%s1896 + $0x20] sm:$0xf]
      %v1906 = vld [vmem:[%s1896 + $0x24] sm:$0xf]
      %v1907 = vld [vmem:[%s1896 + $0x28] sm:$0xf]
      %v1908 = vld [vmem:[%s1896 + $0x2c] sm:$0xf]
      %v1909 = vld [vmem:[%s1896 + $0x30] sm:$0xf]
      %v1910 = vld [vmem:[%s1896 + $0x34] sm:$0xf]
      %v1911 = vld [vmem:[%s1896 + $0x38] sm:$0xf]
      %v1912 = vld [vmem:[%s1896 + $0x3c] sm:$0xf]
      %v1913 = vunpack.c.l.bf16 %v1897
      %v1914 = vunpack.c.l.bf16 %v1898
      %v1915 = vunpack.c.l.bf16 %v1899
      %v1916 = vunpack.c.l.bf16 %v1900
      %v1917 = vunpack.c.l.bf16 %v1901
      %v1918 = vunpack.c.l.bf16 %v1902
      %v1919 = vunpack.c.l.bf16 %v1903
      %v1920 = vunpack.c.l.bf16 %v1904
      %v1921 = vunpack.c.l.bf16 %v1905
      %v1922 = vunpack.c.l.bf16 %v1906
      %v1923 = vunpack.c.l.bf16 %v1907
      %v1924 = vunpack.c.l.bf16 %v1908
      %v1925 = vunpack.c.l.bf16 %v1909
      %v1926 = vunpack.c.l.bf16 %v1910
      %v1927 = vunpack.c.l.bf16 %v1911
      %v1928 = vunpack.c.l.bf16 %v1912
      %1929 = vrot.lane.b32.xlu0 %v431, 104
      %v1930 = vpop.permute.xlu0 %1929
      %1931 = vrot.lane.b32.xlu0 %v432, 104
      %v1932 = vpop.permute.xlu0 %1931
      %1933 = vrot.lane.b32.xlu0 %v433, 104
      %v1934 = vpop.permute.xlu0 %1933
      %1935 = vrot.lane.b32.xlu0 %v434, 104
      %v1936 = vpop.permute.xlu0 %1935
      %1937 = vrot.lane.b32.xlu0 %v435, 104
      %v1938 = vpop.permute.xlu0 %1937
      %1939 = vrot.lane.b32.xlu0 %v436, 104
      %v1940 = vpop.permute.xlu0 %1939
      %1941 = vrot.lane.b32.xlu0 %v437, 104
      %v1942 = vpop.permute.xlu0 %1941
      %1943 = vrot.lane.b32.xlu0 %v438, 104
      %v1944 = vpop.permute.xlu0 %1943
      %1945 = vrot.lane.b32.xlu0 %v439, 72
      %v1946 = vpop.permute.xlu0 %1945
      %1947 = vrot.lane.b32.xlu0 %v440, 72
      %v1948 = vpop.permute.xlu0 %1947
      %1949 = vrot.lane.b32.xlu0 %v441, 72
      %v1950 = vpop.permute.xlu0 %1949
      %1951 = vrot.lane.b32.xlu0 %v442, 72
      %v1952 = vpop.permute.xlu0 %1951
      %1953 = vrot.lane.b32.xlu0 %v443, 72
      %v1954 = vpop.permute.xlu0 %1953
      %1955 = vrot.lane.b32.xlu0 %v444, 72
      %v1956 = vpop.permute.xlu0 %1955
      %1957 = vrot.lane.b32.xlu0 %v445, 72
      %v1958 = vpop.permute.xlu0 %1957
      %1959 = vrot.lane.b32.xlu0 %v446, 72
      %v1960 = vpop.permute.xlu0 %1959
      %v1962 = vsel %vm503, %v1930, 0
      %v1965 = vsel %vm503, %v1932, 0
      %v1968 = vsel %vm503, %v1934, 0
      %v1971 = vsel %vm503, %v1936, 0
      %v1974 = vsel %vm503, %v1938, 0
      %v1977 = vsel %vm503, %v1940, 0
      %v1980 = vsel %vm503, %v1942, 0
      %v1983 = vsel %vm503, %v1944, 0
      %v1986 = vsel %vm503, %v1946, 0
      %v1989 = vsel %vm503, %v1948, 0
      %v1992 = vsel %vm503, %v1950, 0
      %v1995 = vsel %vm503, %v1952, 0
      %v1998 = vsel %vm503, %v1954, 0
      %v2001 = vsel %vm503, %v1956, 0
      %v2004 = vsel %vm503, %v1958, 0
      %v2007 = vsel %vm503, %v1960, 0
      %2009 = vmatprep.subr.bf16.mxu0 0
      %2010 = vmatpush1.bf16.xpose.msra.mxu0 %v1986
      %2011 = vmatprep.subr.bf16.mxu0 0
      %2012 = vmatpush1.bf16.xpose.msra.mxu0 %v1989
      %2013 = vmatprep.subr.bf16.mxu0 0
      %2014 = vmatpush1.bf16.xpose.msra.mxu0 %v1992
      %2015 = vmatprep.subr.bf16.mxu0 0
      %2016 = vmatpush1.bf16.xpose.msra.mxu0 %v1995
      %2017 = vmatprep.subr.bf16.mxu0 0
      %2018 = vmatpush1.bf16.xpose.msra.mxu0 %v1998
      %2019 = vmatprep.subr.bf16.mxu0 0
      %2020 = vmatpush1.bf16.xpose.msra.mxu0 %v2001
      %2021 = vmatprep.subr.bf16.mxu0 0
      %2022 = vmatpush1.bf16.xpose.msra.mxu0 %v2004
      %2023 = vmatprep.subr.bf16.mxu0 0
      %2024 = vmatpush1.bf16.xpose.msra.mxu0 %v2007
      %2025 = vmatprep.subr.bf16.mxu0 0
      %2026 = vmatpush1.bf16.xpose.msra.mxu0 0
      %2027 = vmatprep.subr.bf16.mxu0 0
      %2028 = vmatpush1.bf16.xpose.msra.mxu0 0
      %2029 = vmatprep.subr.bf16.mxu0 0
      %2030 = vmatpush1.bf16.xpose.msra.mxu0 0
      %2031 = vmatprep.subr.bf16.mxu0 0
      %2032 = vmatpush1.bf16.xpose.msra.mxu0 0
      %2033 = vmatprep.subr.bf16.mxu0 0
      %2034 = vmatpush1.bf16.xpose.msra.mxu0 0
      %2035 = vmatprep.subr.bf16.mxu0 0
      %2036 = vmatpush1.bf16.xpose.msra.mxu0 0
      %2037 = vmatprep.subr.bf16.mxu0 0
      %2038 = vmatpush1.bf16.xpose.msra.mxu0 0
      %2039 = vmatprep.subr.bf16.mxu0 0
      %2040 = vmatpush1.bf16.xpose.msra.mxu0 0
      %2041 = vmatprep.mubr.bf16.mxu0 0
      %2042 = vmatmul.mubr.bf16.gmra.mrb[0].mxu0 %v1962
      %v2043 = vpop.f32.mrb[0].mxu0
      %v2044 = vadd.f32 %v1913, %v2043
      %v2045 = vpop.f32.mrb[0].mxu0
      %v2046 = vpop.f32.mrb[0].mxu0
      %v2047 = vadd.f32 %v1914, %v2046
      %v2048 = vpop.f32.mrb[0].mxu0
      %2049 = vmatprep.mubr.bf16.mxu0 0
      %2050 = vmatmul.mubr.bf16.gmra.mrb[0].mxu0 %v1965
      %v2051 = vpop.f32.mrb[0].mxu0
      %v2052 = vadd.f32 %v1915, %v2051
      %v2053 = vpop.f32.mrb[0].mxu0
      %v2054 = vpop.f32.mrb[0].mxu0
      %v2055 = vadd.f32 %v1916, %v2054
      %v2056 = vpop.f32.mrb[0].mxu0
      %2057 = vmatprep.mubr.bf16.mxu0 0
      %2058 = vmatmul.mubr.bf16.gmra.mrb[0].mxu0 %v1968
      %v2059 = vpop.f32.mrb[0].mxu0
      %v2060 = vadd.f32 %v1917, %v2059
      %v2061 = vpop.f32.mrb[0].mxu0
      %v2062 = vpop.f32.mrb[0].mxu0
      %v2063 = vadd.f32 %v1918, %v2062
      %v2064 = vpop.f32.mrb[0].mxu0
      %2065 = vmatprep.mubr.bf16.mxu0 0
      %2066 = vmatmul.mubr.bf16.gmra.mrb[0].mxu0 %v1971
      %v2067 = vpop.f32.mrb[0].mxu0
      %v2068 = vadd.f32 %v1919, %v2067
      %v2069 = vpop.f32.mrb[0].mxu0
      %v2070 = vpop.f32.mrb[0].mxu0
      %v2071 = vadd.f32 %v1920, %v2070
      %v2072 = vpop.f32.mrb[0].mxu0
      %2073 = vmatprep.mubr.bf16.mxu0 0
      %2074 = vmatmul.mubr.bf16.gmra.mrb[0].mxu0 %v1974
      %v2075 = vpop.f32.mrb[0].mxu0
      %v2076 = vadd.f32 %v1921, %v2075
      %v2077 = vpop.f32.mrb[0].mxu0
      %v2078 = vpop.f32.mrb[0].mxu0
      %v2079 = vadd.f32 %v1922, %v2078
      %v2080 = vpop.f32.mrb[0].mxu0
      %2081 = vmatprep.mubr.bf16.mxu0 0
      %2082 = vmatmul.mubr.bf16.gmra.mrb[0].mxu0 %v1977
      %v2083 = vpop.f32.mrb[0].mxu0
      %v2084 = vadd.f32 %v1923, %v2083
      %v2085 = vpop.f32.mrb[0].mxu0
      %v2086 = vpop.f32.mrb[0].mxu0
      %v2087 = vadd.f32 %v1924, %v2086
      %v2088 = vpop.f32.mrb[0].mxu0
      %2089 = vmatprep.mubr.bf16.mxu0 0
      %2090 = vmatmul.mubr.bf16.gmra.mrb[0].mxu0 %v1980
      %v2091 = vpop.f32.mrb[0].mxu0
      %v2092 = vadd.f32 %v1925, %v2091
      %v2093 = vpop.f32.mrb[0].mxu0
      %v2094 = vpop.f32.mrb[0].mxu0
      %v2095 = vadd.f32 %v1926, %v2094
      %v2096 = vpop.f32.mrb[0].mxu0
      %2097 = vmatprep.mubr.bf16.mxu0 0
      %2098 = vmatmul.mubr.bf16.gmra.mrb[0].mxu0 %v1983
      %v2099 = vpop.f32.mrb[0].mxu0
      %v2100 = vadd.f32 %v1927, %v2099
      %v2101 = vpop.f32.mrb[0].mxu0
      %v2102 = vpop.f32.mrb[0].mxu0
      %v2103 = vadd.f32 %v1928, %v2102
      %v2104 = vpop.f32.mrb[0].mxu0
      %2105 = vdwg.mxu0
      %2106 = vmax.xlane.f32.xlu0 %v2044
      %v2107 = vpop.xlane.xlu0 %2106
      %2108 = vmax.xlane.f32.xlu0 %v2047
      %v2109 = vpop.xlane.xlu0 %2108
      %2110 = vmax.xlane.f32.xlu0 %v2052
      %v2111 = vpop.xlane.xlu0 %2110
      %2112 = vmax.xlane.f32.xlu0 %v2055
      %v2113 = vpop.xlane.xlu0 %2112
      %2114 = vmax.xlane.f32.xlu0 %v2060
      %v2115 = vpop.xlane.xlu0 %2114
      %2116 = vmax.xlane.f32.xlu0 %v2063
      %v2117 = vpop.xlane.xlu0 %2116
      %2118 = vmax.xlane.f32.xlu0 %v2068
      %v2119 = vpop.xlane.xlu0 %2118
      %2120 = vmax.xlane.f32.xlu0 %v2071
      %v2121 = vpop.xlane.xlu0 %2120
      %2122 = vmax.xlane.f32.xlu0 %v2076
      %v2123 = vpop.xlane.xlu0 %2122
      %2124 = vmax.xlane.f32.xlu0 %v2079
      %v2125 = vpop.xlane.xlu0 %2124
      %2126 = vmax.xlane.f32.xlu0 %v2084
      %v2127 = vpop.xlane.xlu0 %2126
      %2128 = vmax.xlane.f32.xlu0 %v2087
      %v2129 = vpop.xlane.xlu0 %2128
      %2130 = vmax.xlane.f32.xlu0 %v2092
      %v2131 = vpop.xlane.xlu0 %2130
      %2132 = vmax.xlane.f32.xlu0 %v2095
      %v2133 = vpop.xlane.xlu0 %2132
      %2134 = vmax.xlane.f32.xlu0 %v2100
      %v2135 = vpop.xlane.xlu0 %2134
      %2136 = vmax.xlane.f32.xlu0 %v2103
      %v2137 = vpop.xlane.xlu0 %2136
      %v2138 = vsub.f32 %v2044, %v2107
      %v2139 = vsub.f32 %v2047, %v2109
      %v2140 = vsub.f32 %v2052, %v2111
      %v2141 = vsub.f32 %v2055, %v2113
      %v2142 = vsub.f32 %v2060, %v2115
      %v2143 = vsub.f32 %v2063, %v2117
      %v2144 = vsub.f32 %v2068, %v2119
      %v2145 = vsub.f32 %v2071, %v2121
      %v2146 = vsub.f32 %v2076, %v2123
      %v2147 = vsub.f32 %v2079, %v2125
      %v2148 = vsub.f32 %v2084, %v2127
      %v2149 = vsub.f32 %v2087, %v2129
      %v2150 = vsub.f32 %v2092, %v2131
      %v2151 = vsub.f32 %v2095, %v2133
      %v2152 = vsub.f32 %v2100, %v2135
      %v2153 = vsub.f32 %v2103, %v2137
      %v2154 = vmul.f32 %v2138, 1.442695
      %v2155 = vpow.pop %v2154
      %v2156 = vmul.f32 %v2139, 1.442695
      %v2157 = vpow.pop %v2156
      %v2158 = vmul.f32 %v2140, 1.442695
      %v2159 = vpow.pop %v2158
      %v2160 = vmul.f32 %v2141, 1.442695
      %v2161 = vpow.pop %v2160
      %v2162 = vmul.f32 %v2142, 1.442695
      %v2163 = vpow.pop %v2162
      %v2164 = vmul.f32 %v2143, 1.442695
      %v2165 = vpow.pop %v2164
      %v2166 = vmul.f32 %v2144, 1.442695
      %v2167 = vpow.pop %v2166
      %v2168 = vmul.f32 %v2145, 1.442695
      %v2169 = vpow.pop %v2168
      %v2170 = vmul.f32 %v2146, 1.442695
      %v2171 = vpow.pop %v2170
      %v2172 = vmul.f32 %v2147, 1.442695
      %v2173 = vpow.pop %v2172
      %v2174 = vmul.f32 %v2148, 1.442695
      %v2175 = vpow.pop %v2174
      %v2176 = vmul.f32 %v2149, 1.442695
      %v2177 = vpow.pop %v2176
      %v2178 = vmul.f32 %v2150, 1.442695
      %v2179 = vpow.pop %v2178
      %v2180 = vmul.f32 %v2151, 1.442695
      %v2181 = vpow.pop %v2180
      %v2182 = vmul.f32 %v2152, 1.442695
      %v2183 = vpow.pop %v2182
      %v2184 = vmul.f32 %v2153, 1.442695
      %v2185 = vpow.pop %v2184
      %2186 = vadd.xlane.f32.xlu0 %v2155
      %v2187 = vpop.xlane.xlu0 %2186
      %2188 = vadd.xlane.f32.xlu0 %v2157
      %v2189 = vpop.xlane.xlu0 %2188
      %2190 = vadd.xlane.f32.xlu0 %v2159
      %v2191 = vpop.xlane.xlu0 %2190
      %2192 = vadd.xlane.f32.xlu0 %v2161
      %v2193 = vpop.xlane.xlu0 %2192
      %2194 = vadd.xlane.f32.xlu0 %v2163
      %v2195 = vpop.xlane.xlu0 %2194
      %2196 = vadd.xlane.f32.xlu0 %v2165
      %v2197 = vpop.xlane.xlu0 %2196
      %2198 = vadd.xlane.f32.xlu0 %v2167
      %v2199 = vpop.xlane.xlu0 %2198
      %2200 = vadd.xlane.f32.xlu0 %v2169
      %v2201 = vpop.xlane.xlu0 %2200
      %2202 = vadd.xlane.f32.xlu0 %v2171
      %v2203 = vpop.xlane.xlu0 %2202
      %2204 = vadd.xlane.f32.xlu0 %v2173
      %v2205 = vpop.xlane.xlu0 %2204
      %2206 = vadd.xlane.f32.xlu0 %v2175
      %v2207 = vpop.xlane.xlu0 %2206
      %2208 = vadd.xlane.f32.xlu0 %v2177
      %v2209 = vpop.xlane.xlu0 %2208
      %2210 = vadd.xlane.f32.xlu0 %v2179
      %v2211 = vpop.xlane.xlu0 %2210
      %2212 = vadd.xlane.f32.xlu0 %v2181
      %v2213 = vpop.xlane.xlu0 %2212
      %2214 = vadd.xlane.f32.xlu0 %v2183
      %v2215 = vpop.xlane.xlu0 %2214
      %2216 = vadd.xlane.f32.xlu0 %v2185
      %v2217 = vpop.xlane.xlu0 %2216
      %v2218 = vrcp.pop %v2187
      %v2219 = vrcp.pop %v2189
      %v2220 = vrcp.pop %v2191
      %v2221 = vrcp.pop %v2193
      %v2222 = vrcp.pop %v2195
      %v2223 = vrcp.pop %v2197
      %v2224 = vrcp.pop %v2199
      %v2225 = vrcp.pop %v2201
      %v2226 = vrcp.pop %v2203
      %v2227 = vrcp.pop %v2205
      %v2228 = vrcp.pop %v2207
      %v2229 = vrcp.pop %v2209
      %v2230 = vrcp.pop %v2211
      %v2231 = vrcp.pop %v2213
      %v2232 = vrcp.pop %v2215
      %v2233 = vrcp.pop %v2217
      %v2234 = vpack.c.bf16 %v2157, %v2155
      %v2235 = vpack.c.bf16 %v2161, %v2159
      %v2236 = vpack.c.bf16 %v2165, %v2163
      %v2237 = vpack.c.bf16 %v2169, %v2167
      %v2238 = vpack.c.bf16 %v2173, %v2171
      %v2239 = vpack.c.bf16 %v2177, %v2175
      %v2240 = vpack.c.bf16 %v2181, %v2179
      %v2241 = vpack.c.bf16 %v2185, %v2183
      %2242 = vrot.lane.b32.xlu0 %v439, 40
      %v2243 = vpop.permute.xlu0 %2242
      %2244 = vrot.lane.b32.xlu0 %v440, 40
      %v2245 = vpop.permute.xlu0 %2244
      %2246 = vrot.lane.b32.xlu0 %v441, 40
      %v2247 = vpop.permute.xlu0 %2246
      %2248 = vrot.lane.b32.xlu0 %v442, 40
      %v2249 = vpop.permute.xlu0 %2248
      %2250 = vrot.lane.b32.xlu0 %v443, 40
      %v2251 = vpop.permute.xlu0 %2250
      %2252 = vrot.lane.b32.xlu0 %v444, 40
      %v2253 = vpop.permute.xlu0 %2252
      %2254 = vrot.lane.b32.xlu0 %v445, 40
      %v2255 = vpop.permute.xlu0 %2254
      %2256 = vrot.lane.b32.xlu0 %v446, 40
      %v2257 = vpop.permute.xlu0 %2256
      %2266 = vmatprep.subr.bf16.mxu0 0
      %2267 = vmatpush1.bf16.msra.mxu0 %v2243
      %2268 = vmatprep.subr.bf16.mxu0 0
      %2269 = vmatpush1.bf16.msra.mxu0 %v2245
      %2270 = vmatprep.subr.bf16.mxu0 0
      %2271 = vmatpush1.bf16.msra.mxu0 %v2247
      %2272 = vmatprep.subr.bf16.mxu0 0
      %2273 = vmatpush1.bf16.msra.mxu0 %v2249
      %2274 = vmatprep.subr.bf16.mxu0 0
      %2275 = vmatpush1.bf16.msra.mxu0 %v2251
      %2276 = vmatprep.subr.bf16.mxu0 0
      %2277 = vmatpush1.bf16.msra.mxu0 %v2253
      %2278 = vmatprep.subr.bf16.mxu0 0
      %2279 = vmatpush1.bf16.msra.mxu0 %v2255
      %2280 = vmatprep.subr.bf16.mxu0 0
      %2281 = vmatpush1.bf16.msra.mxu0 %v2257
      %2282 = vmatprep.subr.bf16.mxu0 0
      %2283 = vmatpush1.bf16.msra.mxu0 0
      %2284 = vmatprep.subr.bf16.mxu0 0
      %2285 = vmatpush1.bf16.msra.mxu0 0
      %2286 = vmatprep.subr.bf16.mxu0 0
      %2287 = vmatpush1.bf16.msra.mxu0 0
      %2288 = vmatprep.subr.bf16.mxu0 0
      %2289 = vmatpush1.bf16.msra.mxu0 0
      %2290 = vmatprep.subr.bf16.mxu0 0
      %2291 = vmatpush1.bf16.msra.mxu0 0
      %2292 = vmatprep.subr.bf16.mxu0 0
      %2293 = vmatpush1.bf16.msra.mxu0 0
      %2294 = vmatprep.subr.bf16.mxu0 0
      %2295 = vmatpush1.bf16.msra.mxu0 0
      %2296 = vmatprep.subr.bf16.mxu0 0
      %2297 = vmatpush1.bf16.msra.mxu0 0
      %2298 = vmatprep.mubr.bf16.mxu0 0
      %2299 = vmatmul.mubr.bf16.gmra.mrb[0].mxu0 %v2234
      %v2300 = vpop.f32.mrb[0].mxu0
      %v2301 = vadd.f32 0.0, %v2300
      %v2302 = vpop.f32.mrb[0].mxu0
      %v2303 = vpop.f32.mrb[0].mxu0
      %v2304 = vadd.f32 0.0, %v2303
      %v2305 = vpop.f32.mrb[0].mxu0
      %2306 = vmatprep.mubr.bf16.mxu0 0
      %2307 = vmatmul.mubr.bf16.gmra.mrb[0].mxu0 %v2235
      %v2308 = vpop.f32.mrb[0].mxu0
      %v2309 = vadd.f32 0.0, %v2308
      %v2310 = vpop.f32.mrb[0].mxu0
      %v2311 = vpop.f32.mrb[0].mxu0
      %v2312 = vadd.f32 0.0, %v2311
      %v2313 = vpop.f32.mrb[0].mxu0
      %2314 = vmatprep.mubr.bf16.mxu0 0
      %2315 = vmatmul.mubr.bf16.gmra.mrb[0].mxu0 %v2236
      %v2316 = vpop.f32.mrb[0].mxu0
      %v2317 = vadd.f32 0.0, %v2316
      %v2318 = vpop.f32.mrb[0].mxu0
      %v2319 = vpop.f32.mrb[0].mxu0
      %v2320 = vadd.f32 0.0, %v2319
      %v2321 = vpop.f32.mrb[0].mxu0
      %2322 = vmatprep.mubr.bf16.mxu0 0
      %2323 = vmatmul.mubr.bf16.gmra.mrb[0].mxu0 %v2237
      %v2324 = vpop.f32.mrb[0].mxu0
      %v2325 = vadd.f32 0.0, %v2324
      %v2326 = vpop.f32.mrb[0].mxu0
      %v2327 = vpop.f32.mrb[0].mxu0
      %v2328 = vadd.f32 0.0, %v2327
      %v2329 = vpop.f32.mrb[0].mxu0
      %2330 = vmatprep.mubr.bf16.mxu0 0
      %2331 = vmatmul.mubr.bf16.gmra.mrb[0].mxu0 %v2238
      %v2332 = vpop.f32.mrb[0].mxu0
      %v2333 = vadd.f32 0.0, %v2332
      %v2334 = vpop.f32.mrb[0].mxu0
      %v2335 = vpop.f32.mrb[0].mxu0
      %v2336 = vadd.f32 0.0, %v2335
      %v2337 = vpop.f32.mrb[0].mxu0
      %2338 = vmatprep.mubr.bf16.mxu0 0
      %2339 = vmatmul.mubr.bf16.gmra.mrb[0].mxu0 %v2239
      %v2340 = vpop.f32.mrb[0].mxu0
      %v2341 = vadd.f32 0.0, %v2340
      %v2342 = vpop.f32.mrb[0].mxu0
      %v2343 = vpop.f32.mrb[0].mxu0
      %v2344 = vadd.f32 0.0, %v2343
      %v2345 = vpop.f32.mrb[0].mxu0
      %2346 = vmatprep.mubr.bf16.mxu0 0
      %2347 = vmatmul.mubr.bf16.gmra.mrb[0].mxu0 %v2240
      %v2348 = vpop.f32.mrb[0].mxu0
      %v2349 = vadd.f32 0.0, %v2348
      %v2350 = vpop.f32.mrb[0].mxu0
      %v2351 = vpop.f32.mrb[0].mxu0
      %v2352 = vadd.f32 0.0, %v2351
      %v2353 = vpop.f32.mrb[0].mxu0
      %2354 = vmatprep.mubr.bf16.mxu0 0
      %2355 = vmatmul.mubr.bf16.gmra.mrb[0].mxu0 %v2241
      %v2356 = vpop.f32.mrb[0].mxu0
      %v2357 = vadd.f32 0.0, %v2356
      %v2358 = vpop.f32.mrb[0].mxu0
      %v2359 = vpop.f32.mrb[0].mxu0
      %v2360 = vadd.f32 0.0, %v2359
      %v2361 = vpop.f32.mrb[0].mxu0
      %2362 = vdwg.mxu0
      %v2363 = vmul.f32 %v2301, %v2218
      %v2364 = vmul.f32 %v2304, %v2219
      %v2365 = vmul.f32 %v2309, %v2220
      %v2366 = vmul.f32 %v2312, %v2221
      %v2367 = vmul.f32 %v2317, %v2222
      %v2368 = vmul.f32 %v2320, %v2223
      %v2369 = vmul.f32 %v2325, %v2224
      %v2370 = vmul.f32 %v2328, %v2225
      %v2371 = vmul.f32 %v2333, %v2226
      %v2372 = vmul.f32 %v2336, %v2227
      %v2373 = vmul.f32 %v2341, %v2228
      %v2374 = vmul.f32 %v2344, %v2229
      %v2375 = vmul.f32 %v2349, %v2230
      %v2376 = vmul.f32 %v2352, %v2231
      %v2377 = vmul.f32 %v2357, %v2232
      %v2378 = vmul.f32 %v2360, %v2233
      %2395 = vrot.lane.b32.xlu0 %v1397, 8
      %v2396 = vpop.permute.xlu0 %2395
      %2397 = vrot.lane.b32.xlu0 %v1398, 8
      %v2398 = vpop.permute.xlu0 %2397
      %2399 = vrot.lane.b32.xlu0 %v1399, 8
      %v2400 = vpop.permute.xlu0 %2399
      %2401 = vrot.lane.b32.xlu0 %v1400, 8
      %v2402 = vpop.permute.xlu0 %2401
      %2403 = vrot.lane.b32.xlu0 %v1401, 8
      %v2404 = vpop.permute.xlu0 %2403
      %2405 = vrot.lane.b32.xlu0 %v1402, 8
      %v2406 = vpop.permute.xlu0 %2405
      %2407 = vrot.lane.b32.xlu0 %v1403, 8
      %v2408 = vpop.permute.xlu0 %2407
      %2409 = vrot.lane.b32.xlu0 %v1404, 8
      %v2410 = vpop.permute.xlu0 %2409
      %2411 = vrot.lane.b32.xlu0 %v1405, 8
      %v2412 = vpop.permute.xlu0 %2411
      %2413 = vrot.lane.b32.xlu0 %v1406, 8
      %v2414 = vpop.permute.xlu0 %2413
      %2415 = vrot.lane.b32.xlu0 %v1407, 8
      %v2416 = vpop.permute.xlu0 %2415
      %2417 = vrot.lane.b32.xlu0 %v1408, 8
      %v2418 = vpop.permute.xlu0 %2417
      %2419 = vrot.lane.b32.xlu0 %v1409, 8
      %v2420 = vpop.permute.xlu0 %2419
      %2421 = vrot.lane.b32.xlu0 %v1410, 8
      %v2422 = vpop.permute.xlu0 %2421
      %2423 = vrot.lane.b32.xlu0 %v1411, 8
      %v2424 = vpop.permute.xlu0 %2423
      %2425 = vrot.lane.b32.xlu0 %v1412, 8
      %v2426 = vpop.permute.xlu0 %2425
      %2459 = vrot.lane.b32.xlu0 %v1880, 16
      %v2460 = vpop.permute.xlu0 %2459
      %2461 = vrot.lane.b32.xlu0 %v1881, 16
      %v2462 = vpop.permute.xlu0 %2461
      %2463 = vrot.lane.b32.xlu0 %v1882, 16
      %v2464 = vpop.permute.xlu0 %2463
      %2465 = vrot.lane.b32.xlu0 %v1883, 16
      %v2466 = vpop.permute.xlu0 %2465
      %2467 = vrot.lane.b32.xlu0 %v1884, 16
      %v2468 = vpop.permute.xlu0 %2467
      %2469 = vrot.lane.b32.xlu0 %v1885, 16
      %v2470 = vpop.permute.xlu0 %2469
      %2471 = vrot.lane.b32.xlu0 %v1886, 16
      %v2472 = vpop.permute.xlu0 %2471
      %2473 = vrot.lane.b32.xlu0 %v1887, 16
      %v2474 = vpop.permute.xlu0 %2473
      %2475 = vrot.lane.b32.xlu0 %v1888, 16
      %v2476 = vpop.permute.xlu0 %2475
      %2477 = vrot.lane.b32.xlu0 %v1889, 16
      %v2478 = vpop.permute.xlu0 %2477
      %2479 = vrot.lane.b32.xlu0 %v1890, 16
      %v2480 = vpop.permute.xlu0 %2479
      %2481 = vrot.lane.b32.xlu0 %v1891, 16
      %v2482 = vpop.permute.xlu0 %2481
      %2483 = vrot.lane.b32.xlu0 %v1892, 16
      %v2484 = vpop.permute.xlu0 %2483
      %2485 = vrot.lane.b32.xlu0 %v1893, 16
      %v2486 = vpop.permute.xlu0 %2485
      %2487 = vrot.lane.b32.xlu0 %v1894, 16
      %v2488 = vpop.permute.xlu0 %2487
      %2489 = vrot.lane.b32.xlu0 %v1895, 16
      %v2490 = vpop.permute.xlu0 %2489
      %2523 = vrot.lane.b32.xlu0 %v2363, 24
      %v2524 = vpop.permute.xlu0 %2523
      %2525 = vrot.lane.b32.xlu0 %v2364, 24
      %v2526 = vpop.permute.xlu0 %2525
      %2527 = vrot.lane.b32.xlu0 %v2365, 24
      %v2528 = vpop.permute.xlu0 %2527
      %2529 = vrot.lane.b32.xlu0 %v2366, 24
      %v2530 = vpop.permute.xlu0 %2529
      %2531 = vrot.lane.b32.xlu0 %v2367, 24
      %v2532 = vpop.permute.xlu0 %2531
      %2533 = vrot.lane.b32.xlu0 %v2368, 24
      %v2534 = vpop.permute.xlu0 %2533
      %2535 = vrot.lane.b32.xlu0 %v2369, 24
      %v2536 = vpop.permute.xlu0 %2535
      %2537 = vrot.lane.b32.xlu0 %v2370, 24
      %v2538 = vpop.permute.xlu0 %2537
      %2539 = vrot.lane.b32.xlu0 %v2371, 24
      %v2540 = vpop.permute.xlu0 %2539
      %2541 = vrot.lane.b32.xlu0 %v2372, 24
      %v2542 = vpop.permute.xlu0 %2541
      %2543 = vrot.lane.b32.xlu0 %v2373, 24
      %v2544 = vpop.permute.xlu0 %2543
      %2545 = vrot.lane.b32.xlu0 %v2374, 24
      %v2546 = vpop.permute.xlu0 %2545
      %2547 = vrot.lane.b32.xlu0 %v2375, 24
      %v2548 = vpop.permute.xlu0 %2547
      %2549 = vrot.lane.b32.xlu0 %v2376, 24
      %v2550 = vpop.permute.xlu0 %2549
      %2551 = vrot.lane.b32.xlu0 %v2377, 24
      %v2552 = vpop.permute.xlu0 %2551
      %2553 = vrot.lane.b32.xlu0 %v2378, 24
      %v2554 = vpop.permute.xlu0 %2553
      %v2571 = vsel %vm503, %v906, %v2396
      %v2572 = vsel %vm503, %v907, %v2398
      %v2573 = vsel %vm503, %v908, %v2400
      %v2574 = vsel %vm503, %v909, %v2402
      %v2575 = vsel %vm503, %v910, %v2404
      %v2576 = vsel %vm503, %v911, %v2406
      %v2577 = vsel %vm503, %v912, %v2408
      %v2578 = vsel %vm503, %v913, %v2410
      %v2579 = vsel %vm503, %v914, %v2412
      %v2580 = vsel %vm503, %v915, %v2414
      %v2581 = vsel %vm503, %v916, %v2416
      %v2582 = vsel %vm503, %v917, %v2418
      %v2583 = vsel %vm503, %v918, %v2420
      %v2584 = vsel %vm503, %v919, %v2422
      %v2585 = vsel %vm503, %v920, %v2424
      %v2586 = vsel %vm503, %v921, %v2426
      %vm2587 = vcmask 130048
      %v2588 = vsel %vm2587, %v2571, %v2460
      %v2589 = vsel %vm2587, %v2572, %v2462
      %v2590 = vsel %vm2587, %v2573, %v2464
      %v2591 = vsel %vm2587, %v2574, %v2466
      %v2592 = vsel %vm2587, %v2575, %v2468
      %v2593 = vsel %vm2587, %v2576, %v2470
      %v2594 = vsel %vm2587, %v2577, %v2472
      %v2595 = vsel %vm2587, %v2578, %v2474
      %v2596 = vsel %vm2587, %v2579, %v2476
      %v2597 = vsel %vm2587, %v2580, %v2478
      %v2598 = vsel %vm2587, %v2581, %v2480
      %v2599 = vsel %vm2587, %v2582, %v2482
      %v2600 = vsel %vm2587, %v2583, %v2484
      %v2601 = vsel %vm2587, %v2584, %v2486
      %v2602 = vsel %vm2587, %v2585, %v2488
      %v2603 = vsel %vm2587, %v2586, %v2490
      %vm2604 = vcmask 195584
      %v2605 = vsel %vm2604, %v2588, %v2524
      %v2606 = vsel %vm2604, %v2589, %v2526
      %v2607 = vsel %vm2604, %v2590, %v2528
      %v2608 = vsel %vm2604, %v2591, %v2530
      %v2609 = vsel %vm2604, %v2592, %v2532
      %v2610 = vsel %vm2604, %v2593, %v2534
      %v2611 = vsel %vm2604, %v2594, %v2536
      %v2612 = vsel %vm2604, %v2595, %v2538
      %v2613 = vsel %vm2604, %v2596, %v2540
      %v2614 = vsel %vm2604, %v2597, %v2542
      %v2615 = vsel %vm2604, %v2598, %v2544
      %v2616 = vsel %vm2604, %v2599, %v2546
      %v2617 = vsel %vm2604, %v2600, %v2548
      %v2618 = vsel %vm2604, %v2601, %v2550
      %v2619 = vsel %vm2604, %v2602, %v2552
      %v2620 = vsel %vm2604, %v2603, %v2554
      %v2621 = vpack.c.bf16 %v2606, %v2605
      %v2622 = vpack.c.bf16 %v2608, %v2607
      %v2623 = vpack.c.bf16 %v2610, %v2609
      %v2624 = vpack.c.bf16 %v2612, %v2611
      %v2625 = vpack.c.bf16 %v2614, %v2613
      %v2626 = vpack.c.bf16 %v2616, %v2615
      %v2627 = vpack.c.bf16 %v2618, %v2617
      %v2628 = vpack.c.bf16 %v2620, %v2619
      %v2629 = vld [vmem:[%s3] sm:$0xff]
      %v2630 = vld [vmem:[%s3 + $0x8] sm:$0xff]
      %v2631 = vld [vmem:[%s3 + $0x10] sm:$0xff]
      %v2632 = vld [vmem:[%s3 + $0x18] sm:$0xff]
      %v2633 = vpack.c.bf16 %v2630, %v2629
      %v2634 = vpack.c.bf16 %v2632, %v2631
      %v2635 = vld [vmem:[%s4] sm:$0x1]
      %v2637 = vlaneseq
      %v2638 = vshrl.u32 %v2637, 7
      %v2639 = vsub.s32 0, %v2638
      %v2640 = vrot.slane %v2635, %v2639
      %v2643 = vsel %vm293, %v2621, 0
      %v2646 = vsel %vm293, %v2622, 0
      %v2649 = vsel %vm293, %v2623, 0
      %v2652 = vsel %vm293, %v2624, 0
      %v2655 = vsel %vm293, %v2625, 0
      %v2658 = vsel %vm293, %v2626, 0
      %v2661 = vsel %vm293, %v2627, 0
      %v2664 = vsel %vm293, %v2628, 0
      %2666 = vmatprep.subr.bf16.mxu0 0
      %2667 = vmatpush1.bf16.msra.mxu0 %v2633
      %2668 = vmatprep.subr.bf16.mxu0 0
      %2669 = vmatpush1.bf16.msra.mxu0 %v2634
      %2670 = vmatprep.subr.bf16.mxu0 0
      %2671 = vmatpush1.bf16.msra.mxu0 0
      %2672 = vmatprep.subr.bf16.mxu0 0
      %2673 = vmatpush1.bf16.msra.mxu0 0
      %2674 = vmatprep.subr.bf16.mxu0 0
      %2675 = vmatpush1.bf16.msra.mxu0 0
      %2676 = vmatprep.subr.bf16.mxu0 0
      %2677 = vmatpush1.bf16.msra.mxu0 0
      %2678 = vmatprep.subr.bf16.mxu0 0
      %2679 = vmatpush1.bf16.msra.mxu0 0
      %2680 = vmatprep.subr.bf16.mxu0 0
      %2681 = vmatpush1.bf16.msra.mxu0 0
      %2682 = vmatprep.subr.bf16.mxu0 0
      %2683 = vmatpush1.bf16.msra.mxu0 0
      %2684 = vmatprep.subr.bf16.mxu0 0
      %2685 = vmatpush1.bf16.msra.mxu0 0
      %2686 = vmatprep.subr.bf16.mxu0 0
      %2687 = vmatpush1.bf16.msra.mxu0 0
      %2688 = vmatprep.subr.bf16.mxu0 0
      %2689 = vmatpush1.bf16.msra.mxu0 0
      %2690 = vmatprep.subr.bf16.mxu0 0
      %2691 = vmatpush1.bf16.msra.mxu0 0
      %2692 = vmatprep.subr.bf16.mxu0 0
      %2693 = vmatpush1.bf16.msra.mxu0 0
      %2694 = vmatprep.subr.bf16.mxu0 0
      %2695 = vmatpush1.bf16.msra.mxu0 0
      %2696 = vmatprep.subr.bf16.mxu0 0
      %2697 = vmatpush1.bf16.msra.mxu0 0
      %2698 = vmatprep.mubr.bf16.mxu0 0
      %2699 = vmatmul.mubr.bf16.gmra.mrb[0].mxu0 %v2643
      %v2700 = vpop.f32.mrb[0].mxu0
      %v2701 = vadd.f32 %v2640, %v2700
      %v2702 = vpop.f32.mrb[0].mxu0
      %v2703 = vpop.f32.mrb[0].mxu0
      %v2704 = vadd.f32 %v2640, %v2703
      %v2705 = vpop.f32.mrb[0].mxu0
      %2706 = vmatprep.mubr.bf16.mxu0 0
      %2707 = vmatmul.mubr.bf16.gmra.mrb[0].mxu0 %v2646
      %v2708 = vpop.f32.mrb[0].mxu0
      %v2709 = vadd.f32 %v2640, %v2708
      %v2710 = vpop.f32.mrb[0].mxu0
      %v2711 = vpop.f32.mrb[0].mxu0
      %v2712 = vadd.f32 %v2640, %v2711
      %v2713 = vpop.f32.mrb[0].mxu0
      %2714 = vmatprep.mubr.bf16.mxu0 0
      %2715 = vmatmul.mubr.bf16.gmra.mrb[0].mxu0 %v2649
      %v2716 = vpop.f32.mrb[0].mxu0
      %v2717 = vadd.f32 %v2640, %v2716
      %v2718 = vpop.f32.mrb[0].mxu0
      %v2719 = vpop.f32.mrb[0].mxu0
      %v2720 = vadd.f32 %v2640, %v2719
      %v2721 = vpop.f32.mrb[0].mxu0
      %2722 = vmatprep.mubr.bf16.mxu0 0
      %2723 = vmatmul.mubr.bf16.gmra.mrb[0].mxu0 %v2652
      %v2724 = vpop.f32.mrb[0].mxu0
      %v2725 = vadd.f32 %v2640, %v2724
      %v2726 = vpop.f32.mrb[0].mxu0
      %v2727 = vpop.f32.mrb[0].mxu0
      %v2728 = vadd.f32 %v2640, %v2727
      %v2729 = vpop.f32.mrb[0].mxu0
      %2730 = vmatprep.mubr.bf16.mxu0 0
      %2731 = vmatmul.mubr.bf16.gmra.mrb[0].mxu0 %v2655
      %v2732 = vpop.f32.mrb[0].mxu0
      %v2733 = vadd.f32 %v2640, %v2732
      %v2734 = vpop.f32.mrb[0].mxu0
      %v2735 = vpop.f32.mrb[0].mxu0
      %v2736 = vadd.f32 %v2640, %v2735
      %v2737 = vpop.f32.mrb[0].mxu0
      %2738 = vmatprep.mubr.bf16.mxu0 0
      %2739 = vmatmul.mubr.bf16.gmra.mrb[0].mxu0 %v2658
      %v2740 = vpop.f32.mrb[0].mxu0
      %v2741 = vadd.f32 %v2640, %v2740
      %v2742 = vpop.f32.mrb[0].mxu0
      %v2743 = vpop.f32.mrb[0].mxu0
      %v2744 = vadd.f32 %v2640, %v2743
      %v2745 = vpop.f32.mrb[0].mxu0
      %2746 = vmatprep.mubr.bf16.mxu0 0
      %2747 = vmatmul.mubr.bf16.gmra.mrb[0].mxu0 %v2661
      %v2748 = vpop.f32.mrb[0].mxu0
      %v2749 = vadd.f32 %v2640, %v2748
      %v2750 = vpop.f32.mrb[0].mxu0
      %v2751 = vpop.f32.mrb[0].mxu0
      %v2752 = vadd.f32 %v2640, %v2751
      %v2753 = vpop.f32.mrb[0].mxu0
      %2754 = vmatprep.mubr.bf16.mxu0 0
      %2755 = vmatmul.mubr.bf16.gmra.mrb[0].mxu0 %v2664
      %v2756 = vpop.f32.mrb[0].mxu0
      %v2757 = vadd.f32 %v2640, %v2756
      %v2758 = vpop.f32.mrb[0].mxu0
      %v2759 = vpop.f32.mrb[0].mxu0
      %v2760 = vadd.f32 %v2640, %v2759
      %v2761 = vpop.f32.mrb[0].mxu0
      %2762 = vdwg.mxu0
      %2763 = vst.msk [vmem:[%s253] sm:$0xff] %vm293, %v2701
      %2764 = vst.msk [vmem:[%s253 + $0x8] sm:$0xff] %vm293, %v2704
      %2765 = vst.msk [vmem:[%s253 + $0x10] sm:$0xff] %vm293, %v2709
      %2766 = vst.msk [vmem:[%s253 + $0x18] sm:$0xff] %vm293, %v2712
      %2767 = vst.msk [vmem:[%s253 + $0x20] sm:$0xff] %vm293, %v2717
      %2768 = vst.msk [vmem:[%s253 + $0x28] sm:$0xff] %vm293, %v2720
      %2769 = vst.msk [vmem:[%s253 + $0x30] sm:$0xff] %vm293, %v2725
      %2770 = vst.msk [vmem:[%s253 + $0x38] sm:$0xff] %vm293, %v2728
      %2771 = vst.msk [vmem:[%s253 + $0x40] sm:$0xff] %vm293, %v2733
      %2772 = vst.msk [vmem:[%s253 + $0x48] sm:$0xff] %vm293, %v2736
      %2773 = vst.msk [vmem:[%s253 + $0x50] sm:$0xff] %vm293, %v2741
      %2774 = vst.msk [vmem:[%s253 + $0x58] sm:$0xff] %vm293, %v2744
      %2775 = vst.msk [vmem:[%s253 + $0x60] sm:$0xff] %vm293, %v2749
      %2776 = vst.msk [vmem:[%s253 + $0x68] sm:$0xff] %vm293, %v2752
      %2777 = vst.msk [vmem:[%s253 + $0x70] sm:$0xff] %vm293, %v2757
      %2778 = vst.msk [vmem:[%s253 + $0x78] sm:$0xff] %vm293, %v2760
      %s2779 = smul.u32 16, %s17
      %p2780 = scmp.lt.s32.totalorder %s2779, 31
      %s2781 = scalar_select %p2780, %s2779, 31
      %s2782 = smul.addr %s2781, 8
      %s2783 = scalar_lea.vmem %s6, %s2782
      // Predicated region
      $region45: #{tpu_custom_call.1} parent=43 // pred_check
        %p2784 = pneg %p166
      $region46: #{tpu_custom_call.1} parent=43 // pred_check_branch
        %2786 = sbr.rel (%p2784) target = $region48
      $region47: #{tpu_custom_call.1} parent=43 // pred_region
        %s2787 = smul.u32 16, %s17
      $region48: #{tpu_custom_call.1} parent=43 // pred_fallthru
        _
    $region44: #{tpu_custom_call.1} parent=5 // pred_fallthru
      _
    %p2788 = scmp.le.s32.totalorder 2, %s12
    // Predicated region
    $region49: #{tpu_custom_call.1} parent=5 // pred_check
      %p2789 = pneg %p2788
    $region50: #{tpu_custom_call.1} parent=5 // pred_check_branch
      %2791 = sbr.rel (%p2789) target = $region52
    $region51: #{tpu_custom_call.1} parent=5 // pred_region
      %s2792 = ssub.s32 %s12, 2
      // Predicated region
      $region53: #{tpu_custom_call.1} parent=51 // pred_check
        %p2793 = pneg %p172
      $region54: #{tpu_custom_call.1} parent=51 // pred_check_branch
        %2795 = sbr.rel (%p2793) target = $region56
      $region55: #{tpu_custom_call.1} parent=51 // pred_region
        %s2796 = smul.u32 16, %s18
        %p2797 = scmp.lt.s32.totalorder %s2796, 31
        %s2798 = scalar_select %p2797, %s2796, 31
        %s2799 = smul.addr %s2798, 8
        %s2800 = scalar_lea.vmem %s6, %s2799
      $region56: #{tpu_custom_call.1} parent=51 // pred_fallthru
        _
    $region52: #{tpu_custom_call.1} parent=5 // pred_fallthru
      _
  $region6: #{tpu_custom_call.1} parent=0 // loop_footer
    %s16 = sadd.s32 1, %s12
  $region7: #{tpu_custom_call.1} parent=0 // loop_footer_branch
    %11 = sbr.rel target = $region3
  $region8: #{tpu_custom_call.1} parent=0 // loop_exit
    _

</llo_original>
